<compile_context>
chip_gen: v7x
topology: tpu7x:2x2x1
jax: 0.10.0
libtpu: 0.0.40
codegen_flags: <defaults>
</compile_context>

<pallas_src>
import functools

import jax
import jax.numpy as jnp
import numpy as np
from jax import lax
from jax.experimental import pallas as pl
from jax.experimental.pallas import tpu as pltpu


def _round_up(v, m):
    return (v + m - 1) // m * m


# -------------------- one-time weight packing (NOT in the per-call path) ----------


def pack_params(params):
    """Repack PyTorch-layout weights into the kernel's layouts. Call once at init."""
    conv_w, conv_b, fc1_w, fc1_b, fc2_w, fc2_b, fc3_w, fc3_b = params
    F, C, K, _ = conv_w.shape
    CKK = C * K * K
    CKKp = _round_up(CKK + 1, 8)          # +1 row for the fused conv bias
    D1, fc1_in = fc1_w.shape
    D2 = fc2_w.shape[0]
    P = fc1_in // F                       # pooled spatial size per filter
    Pp = _round_up(P, 128)                # lane-aligned pooled spatial

    # Conv weights flattened (c-major, then kh, kw) with the bias as an extra
    # column that multiplies the all-ones patch row; zero-padded to CKKp.
    wc = jnp.concatenate([conv_w.reshape(F, CKK), conv_b.reshape(F, 1)], axis=1)
    wc = jnp.pad(wc, ((0, 0), (0, CKKp - CKK - 1))).astype(jnp.float32)   # (F, CKKp)

    # fc1 weight in (filter, pooled-spatial, out) order; zero rows for lane padding.
    w1 = fc1_w.reshape(D1, F, P).transpose(1, 2, 0)                        # (F, P, D1)
    w1 = jnp.pad(w1, ((0, 0), (0, Pp - P), (0, 0))).astype(jnp.bfloat16)   # (F, Pp, D1)

    w2 = fc2_w.T.astype(jnp.bfloat16)                                      # (D1, D2)
    w3 = fc3_w.T.astype(jnp.bfloat16)                                      # (D2, 1)
    return (wc, w1, fc1_b.reshape(1, D1).astype(jnp.float32),
            w2, fc2_b.reshape(1, D2).astype(jnp.float32),
            w3, fc3_b.reshape(1, 1).astype(jnp.float32))


# -------------------- fused forward pass --------------------


@functools.partial(jax.jit, static_argnames=("kernel_size", "strides"))
def space_rat_forward(x, packed, *, kernel_size, strides):
    wc, w1p, b1, w2, b2, w3, b3 = packed
    N, C, H, W = x.shape
    K, s = kernel_size, strides
    F, Pp, D1 = w1p.shape
    D2 = w2.shape[1]
    CKKp = wc.shape[1]
    CKK = C * K * K
    Hc = (H - K + 2) // s + 1
    Wc = (W - K + 2) // s + 1
    Hp, Wp = (Hc - 2) // 2 + 1, (Wc - 2) // 2 + 1
    P = Hp * Wp
    assert CKK + 1 <= CKKp and P <= Pp
    blk = N * Pp                          # one 2x2-pool-position lane block (128-aligned)

    # ---- per-call XLA glue: im2col with the 2x2-pool quadrants pre-separated,
    # ---- emitted in bf16 directly in the kernel's (CKKp, 4*N*Pp) layout.
    xp = jnp.pad(x, ((0, 0), (0, 0), (1, 1), (1, 1)))          # Conv2d padding=1
    quads = []
    for kh in range(K):
        for kw in range(K):
            for dh in range(2):
                for dw in range(2):
                    h0, w0 = dh * s + kh, dw * s + kw
                    quads.append(lax.slice(
                        xp, (0, 0, h0, w0),
                        (N, C, h0 + 2 * s * (Hp - 1) + 1, w0 + 2 * s * (Wp - 1) + 1),
                        (1, 1, 2 * s, 2 * s)))                 # (N, C, Hp, Wp)
    pat = jnp.stack(quads, axis=0).astype(jnp.bfloat16)        # (KK*4, N, C, Hp, Wp)
    pat = pat.reshape(K * K, 2, 2, N, C, P)                    # (kk, dh, dw, n, c, p)
    pat = pat.transpose(4, 0, 1, 2, 3, 5)                      # (c, kk, dh, dw, n, p)
    pat = pat.reshape(CKK, 4, N, P)                            # row = c*K*K + kh*K + kw
    ones_row = jnp.ones((1, 4, N, P), jnp.bfloat16)            # multiplies the fused bias
    pad_rows = jnp.zeros((CKKp - CKK - 1, 4, N, P), jnp.bfloat16)
    pat = jnp.concatenate([pat, ones_row, pad_rows], axis=0)   # (CKKp, 4, N, P)
    pat = jnp.pad(pat, ((0, 0), (0, 0), (0, 0), (0, Pp - P)))  # padded lanes -> conv = 0
    patches = pat.reshape(CKKp, 4 * N * Pp)                    # col = q*N*Pp + n*Pp + pp

    def kernel(patches_ref, wc_ref, w1_ref, b1_ref, w2_ref, b2_ref, w3_ref,
               b3_ref, out_ref, h_acc):
        k = pl.program_id(0)

        @pl.when(k == 0)
        def _init():
            h_acc[...] = jnp.zeros_like(h_acc)

        # Filter-k conv (+bias via the ones column) as one MXU matmul:
        # bf16 operands, f32 accumulation, lane-dense (1, 4*N*Pp) output.
        wrow = wc_ref[pl.ds(k, 1), :].astype(jnp.bfloat16)      # (1, CKKp)
        conv = jnp.dot(wrow, patches_ref[...],
                       preferred_element_type=jnp.float32)      # (1, 4*N*Pp)
        # 2x2 max-pool: the four window positions are 128-aligned lane blocks.
        pooled = jnp.maximum(
            jnp.maximum(conv[:, 0 * blk:1 * blk], conv[:, 1 * blk:2 * blk]),
            jnp.maximum(conv[:, 2 * blk:3 * blk], conv[:, 3 * blk:4 * blk]))
        pooled = jnp.maximum(pooled, 0.0)                        # ReLU (commutes with max)
        # (1, N*Pp) -> (N, Pp): assemble batch rows from aligned lane slices.
        feat = jnp.concatenate(
            [pooled[:, n * Pp:(n + 1) * Pp] for n in range(N)], axis=0)
        # Partial fc1: this filter's (N, Pp) x (Pp, D1) contribution, f32 accumulate.
        h_acc[...] += jnp.dot(feat.astype(jnp.bfloat16), w1_ref[0],
                              preferred_element_type=jnp.float32)

        @pl.when(k == pl.num_programs(0) - 1)
        def _finalize():
            h = jnp.maximum(h_acc[...] + b1_ref[...], 0.0)
            # TODO(synk): dropout is identity (eval-mode); training-mode dropout would
            # need pltpu.prng_seed / pltpu.prng_random_bits masking here.
            h = jnp.dot(h.astype(jnp.bfloat16), w2_ref[...],
                        preferred_element_type=jnp.float32) + b2_ref[...]
            h = jnp.maximum(h, 0.0)
            out_ref[...] = jnp.dot(h.astype(jnp.bfloat16), w3_ref[...],
                                   preferred_element_type=jnp.float32) + b3_ref[...]

    return pl.pallas_call(
        kernel,
        out_shape=jax.ShapeDtypeStruct((N, 1), jnp.float32),
        grid_spec=pltpu.PrefetchScalarGridSpec(
            num_scalar_prefetch=0,
            grid=(F,),                                           # reduction over filters
            in_specs=[
                pl.BlockSpec((CKKp, 4 * N * Pp), lambda k: (0, 0)),   # patches (resident)
                pl.BlockSpec((F, CKKp), lambda k: (0, 0)),            # conv w + fused bias
                pl.BlockSpec((1, Pp, D1), lambda k: (k, 0, 0)),       # fc1 w, streamed/step
                pl.BlockSpec((1, D1), lambda k: (0, 0)),              # fc1 b
                pl.BlockSpec((D1, D2), lambda k: (0, 0)),             # fc2 w
                pl.BlockSpec((1, D2), lambda k: (0, 0)),              # fc2 b
                pl.BlockSpec((D2, 1), lambda k: (0, 0)),              # fc3 w
                pl.BlockSpec((1, 1), lambda k: (0, 0)),               # fc3 b
            ],
            out_specs=pl.BlockSpec((N, 1), lambda k: (0, 0)),
            scratch_shapes=[pltpu.VMEM((N, D1), jnp.float32)],        # fc1 accumulator
        ),
        compiler_params=pltpu.CompilerParams(
            dimension_semantics=("arbitrary",)),
    )(patches, wc, w1p, b1, w2, b2, w3, b3)


# -------------------- pure-JAX reference (mirrors the kernel's bf16/f32 arithmetic) ----


def reference_forward(x, params, *, kernel_size, strides):
    conv_w, conv_b, fc1_w, fc1_b, fc2_w, fc2_b, fc3_w, fc3_b = params
    y = lax.conv_general_dilated(
        x.astype(jnp.bfloat16), conv_w.astype(jnp.bfloat16),
        window_strides=(strides, strides), padding=((1, 1), (1, 1)),
        dimension_numbers=("NCHW", "OIHW", "NCHW"),
        preferred_element_type=jnp.float32)
    b = conv_b.astype(jnp.bfloat16).astype(jnp.float32)      # kernel stores bias in bf16
    y = jnp.maximum(y + b.reshape(1, -1, 1, 1), 0.0)
    y = lax.reduce_window(y, -jnp.inf, lax.max, (1, 1, 2, 2), (1, 1, 2, 2), "VALID")
    flat = y.reshape(x.shape[0], -1)

    def mm(a, w):
        return jnp.dot(a.astype(jnp.bfloat16), w.T.astype(jnp.bfloat16),
                       preferred_element_type=jnp.float32)

    h = jnp.maximum(mm(flat, fc1_w) + fc1_b, 0.0)
    h = jnp.maximum(mm(h, fc2_w) + fc2_b, 0.0)
    return mm(h, fc3_w) + fc3_b


# -------------------- main --------------------

if __name__ == "__main__":
    filters, kernel_size, strides, dropout_rate = 4, 3, 1, 0.5
    N, C, H, W = 2, 2, 30, 30                  # module implies 2 in-channels, 30x30 input
    conv_out = (30 - kernel_size + 2) // strides + 1
    pool_out = (conv_out - 2) // 2 + 1
    fc1_in = filters * pool_out ** 2

    key = jax.random.PRNGKey(0)
    ks = jax.random.split(key, 9)

    def u(k, shape, fan_in):
        bnd = 1.0 / np.sqrt(fan_in)
        return jax.random.uniform(k, shape, jnp.float32, -bnd, bnd)

    params = (
        u(ks[0], (filters, C, kernel_size, kernel_size), C * kernel_size ** 2),  # conv1.w
        u(ks[1], (filters,), C * kernel_size ** 2),                              # conv1.b
        u(ks[2], (256, fc1_in), fc1_in),                                         # fc1.w
        u(ks[3], (256,), fc1_in),                                                # fc1.b
        u(ks[4], (128, 256), 256),                                               # fc2.w
        u(ks[5], (128,), 256),                                                   # fc2.b
        u(ks[6], (1, 128), 128),                                                 # fc3.w
        u(ks[7], (1,), 128),                                                     # fc3.b
    )
    x = jax.random.normal(ks[8], (N, C, H, W), jnp.float32)

    packed = pack_params(params)               # one-time weight repack, off the hot path

    out = space_rat_forward(x, packed, kernel_size=kernel_size, strides=strides)
    out = jax.block_until_ready(out)

    ref = reference_forward(x, params, kernel_size=kernel_size, strides=strides)
    np.testing.assert_allclose(np.asarray(out), np.asarray(ref), rtol=1e-2, atol=1e-2)
    print("KERNEL_OK")
</pallas_src>

<mosaic_0001>
module attributes {stable_mosaic.version = 11 : i64} {
  func.func @kernel(%arg0: i32, %arg1: memref<24x2048xbf16, #tpu.memory_space<vmem>>, %arg2: memref<4x24xf32, #tpu.memory_space<vmem>>, %arg3: memref<1x256x256xbf16, #tpu.memory_space<vmem>>, %arg4: memref<1x256xf32, #tpu.memory_space<vmem>>, %arg5: memref<256x128xbf16, #tpu.memory_space<vmem>>, %arg6: memref<1x128xf32, #tpu.memory_space<vmem>>, %arg7: memref<128x1xbf16, #tpu.memory_space<vmem>>, %arg8: memref<1x1xf32, #tpu.memory_space<vmem>>, %arg9: memref<2x1xf32, #tpu.memory_space<vmem>>, %arg10: memref<2x256xf32, #tpu.memory_space<vmem>>) attributes {dimension_semantics = [#tpu.dimension_semantics<arbitrary>], iteration_bounds = array<i64: 4>, scalar_prefetch = 0 : i64, scratch_operands = 1 : i64, tpu.core_type = #tpu.core_type<tc>, window_params = [{pipeline_mode = #tpu.pipeline_mode<synchronous>, transform_indices = @transform_0, window_bounds = array<i64: 24, 2048>}, {pipeline_mode = #tpu.pipeline_mode<synchronous>, transform_indices = @transform_1, window_bounds = array<i64: 4, 24>}, {transform_indices = @transform_2, window_bounds = array<i64: 1, 256, 256>}, {pipeline_mode = #tpu.pipeline_mode<synchronous>, transform_indices = @transform_3, window_bounds = array<i64: 1, 256>}, {pipeline_mode = #tpu.pipeline_mode<synchronous>, transform_indices = @transform_4, window_bounds = array<i64: 256, 128>}, {pipeline_mode = #tpu.pipeline_mode<synchronous>, transform_indices = @transform_5, window_bounds = array<i64: 1, 128>}, {pipeline_mode = #tpu.pipeline_mode<synchronous>, transform_indices = @transform_6, window_bounds = array<i64: 128, 1>}, {pipeline_mode = #tpu.pipeline_mode<synchronous>, transform_indices = @transform_7, window_bounds = array<i64: 1, 1>}, {pipeline_mode = #tpu.pipeline_mode<synchronous>, transform_indices = @transform_8, window_bounds = array<i64: 2, 1>}]} {
    %c0_i32 = arith.constant 0 : i32
    %0 = arith.cmpi eq, %arg0, %c0_i32 : i32
    %1 = arith.extui %0 : i1 to i32
    %c0_i32_0 = arith.constant 0 : i32
    %2 = arith.cmpi ne, %1, %c0_i32_0 : i32
    scf.if %2 {
      %cst_13 = arith.constant 0.000000e+00 : f32
      %30 = vector.broadcast %cst_13 : f32 to vector<2x256xf32>
      %c0_14 = arith.constant 0 : index
      %c0_15 = arith.constant 0 : index
      %31 = vector.load %arg10[%c0_14, %c0_15] : memref<2x256xf32, #tpu.memory_space<vmem>>, vector<2x256xf32>
      tpu.vector_store %arg10[%c0_14, %c0_15], %30 {strides = array<i32>} : memref<2x256xf32, #tpu.memory_space<vmem>>, vector<2x256xf32>,
    } else {
    }
    %3 = arith.index_cast %arg0 : i32 to index
    %c0 = arith.constant 0 : index
    %4 = vector.load %arg2[%3, %c0] : memref<4x24xf32, #tpu.memory_space<vmem>>, vector<1x24xf32>
    %5 = arith.truncf %4 : vector<1x24xf32> to vector<1x24xbf16>
    %c0_1 = arith.constant 0 : index
    %c0_2 = arith.constant 0 : index
    %6 = vector.load %arg1[%c0_1, %c0_2] : memref<24x2048xbf16, #tpu.memory_space<vmem>>, vector<24x2048xbf16>
    %cst = arith.constant dense<0.000000e+00> : vector<1x2048xf32>
    %7 = tpu.matmul %5, %6, %cst {dimension_numbers = #tpu.dot_dimension_numbers<[1], [0], [0], [1], [0, 0, 1, 1], [], []>} : vector<1x24xbf16>, vector<24x2048xbf16>, vector<1x2048xf32> -> vector<1x2048xf32>
    %8 = vector.extract_strided_slice %7 {offsets = [0, 0], sizes = [1, 512], strides = [1, 1]} : vector<1x2048xf32> to vector<1x512xf32>
    %9 = vector.extract_strided_slice %7 {offsets = [0, 512], sizes = [1, 512], strides = [1, 1]} : vector<1x2048xf32> to vector<1x512xf32>
    %10 = arith.maximumf %8, %9 : vector<1x512xf32>
    %11 = vector.extract_strided_slice %7 {offsets = [0, 1024], sizes = [1, 512], strides = [1, 1]} : vector<1x2048xf32> to vector<1x512xf32>
    %12 = vector.extract_strided_slice %7 {offsets = [0, 1536], sizes = [1, 512], strides = [1, 1]} : vector<1x2048xf32> to vector<1x512xf32>
    %13 = arith.maximumf %11, %12 : vector<1x512xf32>
    %14 = arith.maximumf %10, %13 : vector<1x512xf32>
    %cst_3 = arith.constant 0.000000e+00 : f32
    %15 = vector.broadcast %cst_3 : f32 to vector<1x512xf32>
    %16 = arith.maximumf %14, %15 : vector<1x512xf32>
    %17 = vector.extract_strided_slice %16 {offsets = [0, 0], sizes = [1, 256], strides = [1, 1]} : vector<1x512xf32> to vector<1x256xf32>
    %18 = vector.extract_strided_slice %16 {offsets = [0, 256], sizes = [1, 256], strides = [1, 1]} : vector<1x512xf32> to vector<1x256xf32>
    %19 = tpu.concatenate %17, %18 in 0 : vector<1x256xf32>, vector<1x256xf32> -> vector<2x256xf32>
    %c0_4 = arith.constant 0 : index
    %c0_5 = arith.constant 0 : index
    %20 = vector.load %arg10[%c0_4, %c0_5] : memref<2x256xf32, #tpu.memory_space<vmem>>, vector<2x256xf32>
    %21 = arith.truncf %19 : vector<2x256xf32> to vector<2x256xbf16>
    %c0_6 = arith.constant 0 : index
    %c0_7 = arith.constant 0 : index
    %c0_8 = arith.constant 0 : index
    %22 = vector.load %arg3[%c0_6, %c0_7, %c0_8] : memref<1x256x256xbf16, #tpu.memory_space<vmem>>, vector<1x256x256xbf16>
    %23 = vector.shape_cast %22 : vector<1x256x256xbf16> to vector<256x256xbf16>
    %cst_9 = arith.constant dense<0.000000e+00> : vector<2x256xf32>
    %24 = tpu.matmul %21, %23, %cst_9 {dimension_numbers = #tpu.dot_dimension_numbers<[1], [0], [0], [1], [0, 0, 1, 1], [], []>} : vector<2x256xbf16>, vector<256x256xbf16>, vector<2x256xf32> -> vector<2x256xf32>
    %25 = arith.addf %20, %24 : vector<2x256xf32>
    %c0_10 = arith.constant 0 : index
    %c0_11 = arith.constant 0 : index
    %26 = vector.load %arg10[%c0_10, %c0_11] : memref<2x256xf32, #tpu.memory_space<vmem>>, vector<2x256xf32>
    tpu.vector_store %arg10[%c0_10, %c0_11], %25 {strides = array<i32>} : memref<2x256xf32, #tpu.memory_space<vmem>>, vector<2x256xf32>,
    %c3_i32 = arith.constant 3 : i32
    %27 = arith.cmpi eq, %arg0, %c3_i32 : i32
    %28 = arith.extui %27 : i1 to i32
    %c0_i32_12 = arith.constant 0 : i32
    %29 = arith.cmpi ne, %28, %c0_i32_12 : i32
    scf.if %29 {
      %c0_13 = arith.constant 0 : index
      %c0_14 = arith.constant 0 : index
      %30 = vector.load %arg10[%c0_13, %c0_14] : memref<2x256xf32, #tpu.memory_space<vmem>>, vector<2x256xf32>
      %c0_15 = arith.constant 0 : index
      %c0_16 = arith.constant 0 : index
      %31 = vector.load %arg4[%c0_15, %c0_16] : memref<1x256xf32, #tpu.memory_space<vmem>>, vector<1x256xf32>
      %32 = vector.broadcast %31 : vector<1x256xf32> to vector<2x256xf32>
      %33 = arith.addf %30, %32 : vector<2x256xf32>
      %cst_17 = arith.constant 0.000000e+00 : f32
      %34 = vector.broadcast %cst_17 : f32 to vector<2x256xf32>
      %35 = arith.maximumf %33, %34 : vector<2x256xf32>
      %36 = arith.truncf %35 : vector<2x256xf32> to vector<2x256xbf16>
      %c0_18 = arith.constant 0 : index
      %c0_19 = arith.constant 0 : index
      %37 = vector.load %arg5[%c0_18, %c0_19] : memref<256x128xbf16, #tpu.memory_space<vmem>>, vector<256x128xbf16>
      %cst_20 = arith.constant dense<0.000000e+00> : vector<2x128xf32>
      %38 = tpu.matmul %36, %37, %cst_20 {dimension_numbers = #tpu.dot_dimension_numbers<[1], [0], [0], [1], [0, 0, 1, 1], [], []>} : vector<2x256xbf16>, vector<256x128xbf16>, vector<2x128xf32> -> vector<2x128xf32>
      %c0_21 = arith.constant 0 : index
      %c0_22 = arith.constant 0 : index
      %39 = vector.load %arg6[%c0_21, %c0_22] : memref<1x128xf32, #tpu.memory_space<vmem>>, vector<1x128xf32>
      %40 = vector.broadcast %39 : vector<1x128xf32> to vector<2x128xf32>
      %41 = arith.addf %38, %40 : vector<2x128xf32>
      %cst_23 = arith.constant 0.000000e+00 : f32
      %42 = vector.broadcast %cst_23 : f32 to vector<2x128xf32>
      %43 = arith.maximumf %41, %42 : vector<2x128xf32>
      %44 = arith.truncf %43 : vector<2x128xf32> to vector<2x128xbf16>
      %c0_24 = arith.constant 0 : index
      %c0_25 = arith.constant 0 : index
      %45 = vector.load %arg7[%c0_24, %c0_25] : memref<128x1xbf16, #tpu.memory_space<vmem>>, vector<128x1xbf16>
      %cst_26 = arith.constant dense<0.000000e+00> : vector<2x1xf32>
      %46 = tpu.matmul %44, %45, %cst_26 {dimension_numbers = #tpu.dot_dimension_numbers<[1], [0], [0], [1], [0, 0, 1, 1], [], []>} : vector<2x128xbf16>, vector<128x1xbf16>, vector<2x1xf32> -> vector<2x1xf32>
      %c0_27 = arith.constant 0 : index
      %c0_28 = arith.constant 0 : index
      %47 = vector.load %arg8[%c0_27, %c0_28] : memref<1x1xf32, #tpu.memory_space<vmem>>, vector<1x1xf32>
      %48 = vector.broadcast %47 : vector<1x1xf32> to vector<2x1xf32>
      %49 = arith.addf %46, %48 : vector<2x1xf32>
      %c0_29 = arith.constant 0 : index
      %c0_30 = arith.constant 0 : index
      %50 = vector.load %arg9[%c0_29, %c0_30] : memref<2x1xf32, #tpu.memory_space<vmem>>, vector<2x1xf32>
      tpu.vector_store %arg9[%c0_29, %c0_30], %49 {strides = array<i32>} : memref<2x1xf32, #tpu.memory_space<vmem>>, vector<2x1xf32>,
    } else {
    }
    return
  }
  func.func @transform_0(%arg0: i32) -> (i32, i32) {
    %c0_i32 = arith.constant 0 : i32
    %c0_i32_0 = arith.constant 0 : i32
    %c0_i32_1 = arith.constant 0 : i32
    return %c0_i32, %c0_i32_0 : i32, i32
  }
  func.func @transform_1(%arg0: i32) -> (i32, i32) {
    %c0_i32 = arith.constant 0 : i32
    %c0_i32_0 = arith.constant 0 : i32
    %c0_i32_1 = arith.constant 0 : i32
    return %c0_i32, %c0_i32_0 : i32, i32
  }
  func.func @transform_2(%arg0: i32) -> (i32, i32, i32) {
    %c0_i32 = arith.constant 0 : i32
    %c0_i32_0 = arith.constant 0 : i32
    %c0_i32_1 = arith.constant 0 : i32
    return %arg0, %c0_i32, %c0_i32_0 : i32, i32, i32
  }
  func.func @transform_3(%arg0: i32) -> (i32, i32) {
    %c0_i32 = arith.constant 0 : i32
    %c0_i32_0 = arith.constant 0 : i32
    %c0_i32_1 = arith.constant 0 : i32
    return %c0_i32, %c0_i32_0 : i32, i32
  }
  func.func @transform_4(%arg0: i32) -> (i32, i32) {
    %c0_i32 = arith.constant 0 : i32
    %c0_i32_0 = arith.constant 0 : i32
    %c0_i32_1 = arith.constant 0 : i32
    return %c0_i32, %c0_i32_0 : i32, i32
  }
  func.func @transform_5(%arg0: i32) -> (i32, i32) {
    %c0_i32 = arith.constant 0 : i32
    %c0_i32_0 = arith.constant 0 : i32
    %c0_i32_1 = arith.constant 0 : i32
    return %c0_i32, %c0_i32_0 : i32, i32
  }
  func.func @transform_6(%arg0: i32) -> (i32, i32) {
    %c0_i32 = arith.constant 0 : i32
    %c0_i32_0 = arith.constant 0 : i32
    %c0_i32_1 = arith.constant 0 : i32
    return %c0_i32, %c0_i32_0 : i32, i32
  }
  func.func @transform_7(%arg0: i32) -> (i32, i32) {
    %c0_i32 = arith.constant 0 : i32
    %c0_i32_0 = arith.constant 0 : i32
    %c0_i32_1 = arith.constant 0 : i32
    return %c0_i32, %c0_i32_0 : i32, i32
  }
  func.func @transform_8(%arg0: i32) -> (i32, i32) {
    %c0_i32 = arith.constant 0 : i32
    %c0_i32_0 = arith.constant 0 : i32
    %c0_i32_1 = arith.constant 0 : i32
    return %c0_i32, %c0_i32_0 : i32, i32
  }
}

</mosaic_0001>

<llo_original>
// kernel: space_rat_forward.1
$region0: #{space_rat_forward.1}
  #allocation0 [shape = 'u32[]', space=smem, size = 0x4, offset = 0x4, fixed_abs, tag = 'smem constant byte address 0x4 - core index']
  #allocation1 [shape = 'u32[144,128]{1,0:T(1,128)}', space=vmem, size = 0x12000, scoped, tag = 'internal scratch']
  #allocation2 [shape = 'f32[2,256]{1,0:T(2,128)}', space=vmem, size = 0x800, scoped, tag = 'scratch operand']
  #allocation3 [shape = 'f32[1,1]{1,0:T(1,128)S(1)}', space=vmem, size = 0x200, scoped, tag = 'scoped memory for space_rat_forward.1']
  %s0 = inlined_call_operand.vmem [shape: bf16[24,2048], index: 0, kind: input, shape index: {}]
  %s1 = inlined_call_operand.vmem [shape: f32[4,24], index: 1, kind: input, shape index: {}]
  %s2 = inlined_call_operand.vmem [shape: bf16[4,256,256], index: 2, kind: input, shape index: {}]
  %s3 = inlined_call_operand.vmem [shape: f32[1,256], index: 3, kind: input, shape index: {}]
  %s4 = inlined_call_operand.vmem [shape: bf16[256,128], index: 4, kind: input, shape index: {}]
  %s5 = inlined_call_operand.vmem [shape: f32[1,128], index: 5, kind: input, shape index: {}]
  %s6 = inlined_call_operand.vmem [shape: bf16[128,1], index: 6, kind: input, shape index: {}]
  %s7 = inlined_call_operand.<no memory space> [shape: f32[1,1], index: 7, kind: input, shape index: {}]
  %s8 = inlined_call_operand.vmem [shape: f32[2,1], index: 8, kind: output, shape index: {}]
  %s9 = sld [smem:[#allocation0]]
  $region73: #{space_rat_forward.1} parent=0
    _
  %s11 = ssub.s32 1, %s9
  %s12 = scalar_select 0, %s11, %s9
  %v13 = vstv %s7
  %14 = vst [vmem:[#allocation3] sm:$0x1] %v13
  loop: start=0, step=1, limit=6
  $region2: #{space_rat_forward.1} parent=0 // loop_pre_header
    _
  $region3: #{space_rat_forward.1} parent=0 // loop_header
    %s16 = sphi 0, %s20
    %p17 = scmp.ge.s32.totalorder %s16, 6
    %s24 = sphi 0, %s24
    %s26 = sphi 0, %s24
    %s27 = sphi 0, %s26
    %s41 = sphi 0, %s27
    %s45 = sphi 0, %s45
    %s47 = sphi 0, %s45
    %s48 = sphi 0, %s47
    %s62 = sphi 0, %s48
    %s68 = sphi 0, %s70
    %s71 = sphi 0, %s68
    %s72 = sphi 0, %s71
    %s88 = sphi 0, %s72
    %s92 = sphi 0, %s92
    %s94 = sphi 0, %s92
    %s95 = sphi 0, %s94
    %s109 = sphi 0, %s95
    %s113 = sphi 0, %s113
    %s115 = sphi 0, %s113
    %s116 = sphi 0, %s115
    %s130 = sphi 0, %s116
    %s134 = sphi 0, %s134
    %s136 = sphi 0, %s134
    %s137 = sphi 0, %s136
    %s151 = sphi 0, %s137
    %s155 = sphi 0, %s155
    %s157 = sphi 0, %s155
    %s158 = sphi 0, %s157
    %s172 = sphi 0, %s158
    %s176 = sphi 0, %s176
    %s178 = sphi 0, %s176
    %s179 = sphi 0, %s178
    %s193 = sphi 0, %s179
    %s197 = sphi 0, %s197
    %s199 = sphi 0, %s197
    %s200 = sphi 0, %s199
    %s214 = sphi 0, %s200
  $region4: #{space_rat_forward.1} parent=0 // loop_header_branch
    %19 = sbr.rel (%p17) target = $region8
  $region5: #{space_rat_forward.1} parent=0 // loop_body
    %s21 = ssub.s32 %s16, 1
    %s22 = ssub.s32 %s16, 2
    %s23 = sadd.s32 %s16, 1
    %s25 = sadd.s32 %s24, 1
    %p28 = scmp.eq.s32.totalorder %s16, 3
    %p29 = scmp.ne.s32.totalorder %s24, %s26
    %p30 = scmp.eq.s32.totalorder %s16, 0
    %p31 = por %p29, %p30
    %p32 = scmp.ne.s32.totalorder %s24, %s26
    %p33 = scmp.eq.s32.totalorder %s21, 3
    %p34 = por %p32, %p33
    %p35 = scmp.ne.s32.totalorder %s26, %s27
    %p36 = scmp.eq.s32.totalorder %s21, 0
    %p37 = por %p35, %p36
    %p38 = scmp.ne.s32.totalorder %s26, %s27
    %p39 = scmp.eq.s32.totalorder %s22, 3
    %p40 = por %p38, %p39
    %p42 = scmp.ne.s32.totalorder %s27, %s41
    %p43 = scmp.eq.s32.totalorder %s22, 0
    %p44 = por %p42, %p43
    %s46 = sadd.s32 %s45, 1
    %p49 = scmp.eq.s32.totalorder %s16, 3
    %p50 = scmp.ne.s32.totalorder %s45, %s47
    %p51 = scmp.eq.s32.totalorder %s16, 0
    %p52 = por %p50, %p51
    %p53 = scmp.ne.s32.totalorder %s45, %s47
    %p54 = scmp.eq.s32.totalorder %s21, 3
    %p55 = por %p53, %p54
    %p56 = scmp.ne.s32.totalorder %s47, %s48
    %p57 = scmp.eq.s32.totalorder %s21, 0
    %p58 = por %p56, %p57
    %p59 = scmp.ne.s32.totalorder %s47, %s48
    %p60 = scmp.eq.s32.totalorder %s22, 3
    %p61 = por %p59, %p60
    %p63 = scmp.ne.s32.totalorder %s48, %s62
    %p64 = scmp.eq.s32.totalorder %s22, 0
    %p65 = por %p63, %p64
    %s66 = ssub.s32 %s16, %s23
    %p67 = scmp.eq.s32.totalorder %s66, 0
    %s69 = sadd.s32 %s68, 1
    %s70 = scalar_select %p67, %s68, %s69
    %p73 = pneg %p67
    %p74 = scmp.eq.s32.totalorder %s16, 3
    %p75 = por %p73, %p74
    %p76 = scmp.ne.s32.totalorder %s68, %s71
    %p77 = scmp.eq.s32.totalorder %s16, 0
    %p78 = por %p76, %p77
    %p79 = scmp.ne.s32.totalorder %s68, %s71
    %p80 = scmp.eq.s32.totalorder %s21, 3
    %p81 = por %p79, %p80
    %p82 = scmp.ne.s32.totalorder %s71, %s72
    %p83 = scmp.eq.s32.totalorder %s21, 0
    %p84 = por %p82, %p83
    %p85 = scmp.ne.s32.totalorder %s71, %s72
    %p86 = scmp.eq.s32.totalorder %s22, 3
    %p87 = por %p85, %p86
    %p89 = scmp.ne.s32.totalorder %s72, %s88
    %p90 = scmp.eq.s32.totalorder %s22, 0
    %p91 = por %p89, %p90
    %s93 = sadd.s32 %s92, 1
    %p96 = scmp.eq.s32.totalorder %s16, 3
    %p97 = scmp.ne.s32.totalorder %s92, %s94
    %p98 = scmp.eq.s32.totalorder %s16, 0
    %p99 = por %p97, %p98
    %p100 = scmp.ne.s32.totalorder %s92, %s94
    %p101 = scmp.eq.s32.totalorder %s21, 3
    %p102 = por %p100, %p101
    %p103 = scmp.ne.s32.totalorder %s94, %s95
    %p104 = scmp.eq.s32.totalorder %s21, 0
    %p105 = por %p103, %p104
    %p106 = scmp.ne.s32.totalorder %s94, %s95
    %p107 = scmp.eq.s32.totalorder %s22, 3
    %p108 = por %p106, %p107
    %p110 = scmp.ne.s32.totalorder %s95, %s109
    %p111 = scmp.eq.s32.totalorder %s22, 0
    %p112 = por %p110, %p111
    %s114 = sadd.s32 %s113, 1
    %p117 = scmp.eq.s32.totalorder %s16, 3
    %p118 = scmp.ne.s32.totalorder %s113, %s115
    %p119 = scmp.eq.s32.totalorder %s16, 0
    %p120 = por %p118, %p119
    %p121 = scmp.ne.s32.totalorder %s113, %s115
    %p122 = scmp.eq.s32.totalorder %s21, 3
    %p123 = por %p121, %p122
    %p124 = scmp.ne.s32.totalorder %s115, %s116
    %p125 = scmp.eq.s32.totalorder %s21, 0
    %p126 = por %p124, %p125
    %p127 = scmp.ne.s32.totalorder %s115, %s116
    %p128 = scmp.eq.s32.totalorder %s22, 3
    %p129 = por %p127, %p128
    %p131 = scmp.ne.s32.totalorder %s116, %s130
    %p132 = scmp.eq.s32.totalorder %s22, 0
    %p133 = por %p131, %p132
    %s135 = sadd.s32 %s134, 1
    %p138 = scmp.eq.s32.totalorder %s16, 3
    %p139 = scmp.ne.s32.totalorder %s134, %s136
    %p140 = scmp.eq.s32.totalorder %s16, 0
    %p141 = por %p139, %p140
    %p142 = scmp.ne.s32.totalorder %s134, %s136
    %p143 = scmp.eq.s32.totalorder %s21, 3
    %p144 = por %p142, %p143
    %p145 = scmp.ne.s32.totalorder %s136, %s137
    %p146 = scmp.eq.s32.totalorder %s21, 0
    %p147 = por %p145, %p146
    %p148 = scmp.ne.s32.totalorder %s136, %s137
    %p149 = scmp.eq.s32.totalorder %s22, 3
    %p150 = por %p148, %p149
    %p152 = scmp.ne.s32.totalorder %s137, %s151
    %p153 = scmp.eq.s32.totalorder %s22, 0
    %p154 = por %p152, %p153
    %s156 = sadd.s32 %s155, 1
    %p159 = scmp.eq.s32.totalorder %s16, 3
    %p160 = scmp.ne.s32.totalorder %s155, %s157
    %p161 = scmp.eq.s32.totalorder %s16, 0
    %p162 = por %p160, %p161
    %p163 = scmp.ne.s32.totalorder %s155, %s157
    %p164 = scmp.eq.s32.totalorder %s21, 3
    %p165 = por %p163, %p164
    %p166 = scmp.ne.s32.totalorder %s157, %s158
    %p167 = scmp.eq.s32.totalorder %s21, 0
    %p168 = por %p166, %p167
    %p169 = scmp.ne.s32.totalorder %s157, %s158
    %p170 = scmp.eq.s32.totalorder %s22, 3
    %p171 = por %p169, %p170
    %p173 = scmp.ne.s32.totalorder %s158, %s172
    %p174 = scmp.eq.s32.totalorder %s22, 0
    %p175 = por %p173, %p174
    %s177 = sadd.s32 %s176, 1
    %p180 = scmp.eq.s32.totalorder %s16, 3
    %p181 = scmp.ne.s32.totalorder %s176, %s178
    %p182 = scmp.eq.s32.totalorder %s16, 0
    %p183 = por %p181, %p182
    %p184 = scmp.ne.s32.totalorder %s176, %s178
    %p185 = scmp.eq.s32.totalorder %s21, 3
    %p186 = por %p184, %p185
    %p187 = scmp.ne.s32.totalorder %s178, %s179
    %p188 = scmp.eq.s32.totalorder %s21, 0
    %p189 = por %p187, %p188
    %p190 = scmp.ne.s32.totalorder %s178, %s179
    %p191 = scmp.eq.s32.totalorder %s22, 3
    %p192 = por %p190, %p191
    %p194 = scmp.ne.s32.totalorder %s179, %s193
    %p195 = scmp.eq.s32.totalorder %s22, 0
    %p196 = por %p194, %p195
    %s198 = sadd.s32 %s197, 1
    %p201 = scmp.eq.s32.totalorder %s16, 3
    %p202 = scmp.ne.s32.totalorder %s197, %s199
    %p203 = scmp.eq.s32.totalorder %s16, 0
    %p204 = por %p202, %p203
    %p205 = scmp.ne.s32.totalorder %s197, %s199
    %p206 = scmp.eq.s32.totalorder %s21, 3
    %p207 = por %p205, %p206
    %p208 = scmp.ne.s32.totalorder %s199, %s200
    %p209 = scmp.eq.s32.totalorder %s21, 0
    %p210 = por %p208, %p209
    %p211 = scmp.ne.s32.totalorder %s199, %s200
    %p212 = scmp.eq.s32.totalorder %s22, 3
    %p213 = por %p211, %p212
    %p215 = scmp.ne.s32.totalorder %s200, %s214
    %p216 = scmp.eq.s32.totalorder %s22, 0
    %p217 = por %p215, %p216
    %p218 = scmp.le.s32.totalorder 1, %s16
    %p219 = scmp.lt.s32.totalorder %s16, 5
    %p220 = pnand %p218, %p219
    %p221 = pneg %p220
    // Predicated region
    $region9: #{space_rat_forward.1} parent=5 // pred_check
      _
    $region10: #{space_rat_forward.1} parent=5 // pred_check_branch
      %223 = sbr.rel (%p220) target = $region12
    $region11: #{space_rat_forward.1} parent=5 // pred_region
      %s224 = ssub.s32 %s16, 1
      // Predicated region
      $region13: #{space_rat_forward.1} parent=11 // pred_check
        %p225 = pneg %p37
      $region14: #{space_rat_forward.1} parent=11 // pred_check_branch
        %227 = sbr.rel (%p225) target = $region16
      $region15: #{space_rat_forward.1} parent=11 // pred_region
        _
      $region16: #{space_rat_forward.1} parent=11 // pred_fallthru
        _
      // Predicated region
      $region17: #{space_rat_forward.1} parent=11 // pred_check
        %p228 = pneg %p58
      $region18: #{space_rat_forward.1} parent=11 // pred_check_branch
        %230 = sbr.rel (%p228) target = $region20
      $region19: #{space_rat_forward.1} parent=11 // pred_region
        _
      $region20: #{space_rat_forward.1} parent=11 // pred_fallthru
        _
      // Predicated region
      $region21: #{space_rat_forward.1} parent=11 // pred_check
        %p231 = pneg %p105
      $region22: #{space_rat_forward.1} parent=11 // pred_check_branch
        %233 = sbr.rel (%p231) target = $region24
      $region23: #{space_rat_forward.1} parent=11 // pred_region
        _
      $region24: #{space_rat_forward.1} parent=11 // pred_fallthru
        _
      // Predicated region
      $region25: #{space_rat_forward.1} parent=11 // pred_check
        %p234 = pneg %p126
      $region26: #{space_rat_forward.1} parent=11 // pred_check_branch
        %236 = sbr.rel (%p234) target = $region28
      $region27: #{space_rat_forward.1} parent=11 // pred_region
        _
      $region28: #{space_rat_forward.1} parent=11 // pred_fallthru
        _
      // Predicated region
      $region29: #{space_rat_forward.1} parent=11 // pred_check
        %p237 = pneg %p147
      $region30: #{space_rat_forward.1} parent=11 // pred_check_branch
        %239 = sbr.rel (%p237) target = $region32
      $region31: #{space_rat_forward.1} parent=11 // pred_region
        _
      $region32: #{space_rat_forward.1} parent=11 // pred_fallthru
        _
      // Predicated region
      $region33: #{space_rat_forward.1} parent=11 // pred_check
        %p240 = pneg %p168
      $region34: #{space_rat_forward.1} parent=11 // pred_check_branch
        %242 = sbr.rel (%p240) target = $region36
      $region35: #{space_rat_forward.1} parent=11 // pred_region
        _
      $region36: #{space_rat_forward.1} parent=11 // pred_fallthru
        _
      // Predicated region
      $region37: #{space_rat_forward.1} parent=11 // pred_check
        %p243 = pneg %p189
      $region38: #{space_rat_forward.1} parent=11 // pred_check_branch
        %245 = sbr.rel (%p243) target = $region40
      $region39: #{space_rat_forward.1} parent=11 // pred_region
        _
      $region40: #{space_rat_forward.1} parent=11 // pred_fallthru
        _
    $region12: #{space_rat_forward.1} parent=5 // pred_fallthru
      _
    %p246 = scmp.lt.s32.totalorder %s16, 4
    // Predicated region
    $region41: #{space_rat_forward.1} parent=5 // pred_check
      %p247 = pneg %p246
    $region42: #{space_rat_forward.1} parent=5 // pred_check_branch
      %249 = sbr.rel (%p247) target = $region44
    $region43: #{space_rat_forward.1} parent=5 // pred_region
      // Predicated region
      $region45: #{space_rat_forward.1} parent=43 // pred_check
        %p250 = pneg %p78
      $region46: #{space_rat_forward.1} parent=43 // pred_check_branch
        %252 = sbr.rel (%p250) target = $region48
      $region47: #{space_rat_forward.1} parent=43 // pred_region
        %p253 = scmp.lt.s32.totalorder %s16, 3
        %s254 = scalar_select %p253, %s16, 3
        %s255 = smul.addr %s254, 64
        %s256 = smul.addr %s255, 4
        %s257 = scalar_lea.vmem %s2, %s256
      $region48: #{space_rat_forward.1} parent=43 // pred_fallthru
        _
    $region44: #{space_rat_forward.1} parent=5 // pred_fallthru
      _
    %p258 = scmp.le.s32.totalorder 1, %s16
    %p259 = scmp.lt.s32.totalorder %s16, 5
    %p260 = pnand %p258, %p259
    %p261 = pneg %p260
    // Predicated region
    $region49: #{space_rat_forward.1} parent=5 // pred_check
      _
    $region50: #{space_rat_forward.1} parent=5 // pred_check_branch
      %263 = sbr.rel (%p260) target = $region52
    $region51: #{space_rat_forward.1} parent=5 // pred_region
      %s264 = ssub.s32 %s16, 1
      %p265 = pneg %p37
      %p266 = pneg %p34
      %p267 = pneg %p58
      %p268 = pneg %p55
      %p269 = scmp.lt.s32.totalorder %s21, 3
      %s270 = scalar_select %p269, %s21, 3
      %s271 = smul.addr %s270, 64
      %s272 = smul.addr %s271, 4
      %s273 = scalar_lea.vmem %s2, %s272
      %p274 = pneg %p84
      %p275 = pneg %p81
      %p276 = pneg %p105
      %p277 = pneg %p102
      %p278 = pneg %p126
      %p279 = pneg %p123
      %p280 = pneg %p147
      %p281 = pneg %p144
      %p282 = pneg %p168
      %p283 = pneg %p165
      %p284 = pneg %p189
      %p285 = pneg %p186
      %p286 = pneg %p210
      %p287 = pneg %p207
      %p288 = scmp.lt.s32.totalorder %s21, 3
      %s289 = scalar_select %p288, %s21, 3
      %s290 = smul.addr %s289, 64
      %s291 = smul.addr %s290, 4
      %s292 = scalar_lea.vmem %s2, %s291
      %p294 = scmp.eq.s32.totalorder %s21, 0
      // Predicated region
      $region53: #{space_rat_forward.1} parent=51 // pred_check
        %p295 = pneg %p294
      $region54: #{space_rat_forward.1} parent=51 // pred_check_branch
        %297 = sbr.rel (%p295) target = $region56
      $region55: #{space_rat_forward.1} parent=51 // pred_region
        %298 = vst [vmem:[#allocation2] sm:$0xf] 0.0
      $region56: #{space_rat_forward.1} parent=51 // pred_fallthru
        _
      %s299 = scalar_lea.vmem %s1, %s21
      %v300 = vld [vmem:[%s299] sm:$0x1]
      %v301 = vpack.c.bf16 %v300, %v300
      %v302 = vld [vmem:[%s0] sm:$0xff]
      %v303 = vld [vmem:[%s0 + $0x8] sm:$0xff]
      %v304 = vld [vmem:[%s0 + $0x10] sm:$0xff]
      %v305 = vld [vmem:[%s0 + $0x18] sm:$0xff]
      %v306 = vld [vmem:[%s0 + $0x20] sm:$0xff]
      %v307 = vld [vmem:[%s0 + $0x28] sm:$0xff]
      %v308 = vld [vmem:[%s0 + $0x30] sm:$0xff]
      %v309 = vld [vmem:[%s0 + $0x38] sm:$0xff]
      %v310 = vld [vmem:[%s0 + $0x40] sm:$0xff]
      %v311 = vld [vmem:[%s0 + $0x48] sm:$0xff]
      %v312 = vld [vmem:[%s0 + $0x50] sm:$0xff]
      %v313 = vld [vmem:[%s0 + $0x58] sm:$0xff]
      %v314 = vld [vmem:[%s0 + $0x60] sm:$0xff]
      %v315 = vld [vmem:[%s0 + $0x68] sm:$0xff]
      %v316 = vld [vmem:[%s0 + $0x70] sm:$0xff]
      %v317 = vld [vmem:[%s0 + $0x78] sm:$0xff]
      %v318 = vld [vmem:[%s0 + $0x80] sm:$0xff]
      %v319 = vld [vmem:[%s0 + $0x88] sm:$0xff]
      %v320 = vld [vmem:[%s0 + $0x90] sm:$0xff]
      %v321 = vld [vmem:[%s0 + $0x98] sm:$0xff]
      %v322 = vld [vmem:[%s0 + $0xa0] sm:$0xff]
      %v323 = vld [vmem:[%s0 + $0xa8] sm:$0xff]
      %v324 = vld [vmem:[%s0 + $0xb0] sm:$0xff]
      %v325 = vld [vmem:[%s0 + $0xb8] sm:$0xff]
      %v350 = vunpack.c.l.b16 %v302
      %v351 = vunpack.c.h.b16 %v302
      %v352 = vunpack.c.l.b16 %v303
      %v353 = vunpack.c.h.b16 %v303
      %v354 = vunpack.c.l.b16 %v304
      %v355 = vunpack.c.h.b16 %v304
      %v356 = vunpack.c.l.b16 %v305
      %v357 = vunpack.c.h.b16 %v305
      %v358 = vunpack.c.l.b16 %v306
      %v359 = vunpack.c.h.b16 %v306
      %v360 = vunpack.c.l.b16 %v307
      %v361 = vunpack.c.h.b16 %v307
      %v362 = vunpack.c.l.b16 %v308
      %v363 = vunpack.c.h.b16 %v308
      %v364 = vunpack.c.l.b16 %v309
      %v365 = vunpack.c.h.b16 %v309
      %v366 = vunpack.c.l.b16 %v310
      %v367 = vunpack.c.h.b16 %v310
      %v368 = vunpack.c.l.b16 %v311
      %v369 = vunpack.c.h.b16 %v311
      %v370 = vunpack.c.l.b16 %v312
      %v371 = vunpack.c.h.b16 %v312
      %v372 = vunpack.c.l.b16 %v313
      %v373 = vunpack.c.h.b16 %v313
      %v374 = vunpack.c.l.b16 %v314
      %v375 = vunpack.c.h.b16 %v314
      %v376 = vunpack.c.l.b16 %v315
      %v377 = vunpack.c.h.b16 %v315
      %v378 = vunpack.c.l.b16 %v316
      %v379 = vunpack.c.h.b16 %v316
      %v380 = vunpack.c.l.b16 %v317
      %v381 = vunpack.c.h.b16 %v317
      %v382 = vunpack.c.l.b16 %v318
      %v383 = vunpack.c.h.b16 %v318
      %v384 = vunpack.c.l.b16 %v319
      %v385 = vunpack.c.h.b16 %v319
      %v386 = vunpack.c.l.b16 %v320
      %v387 = vunpack.c.h.b16 %v320
      %v388 = vunpack.c.l.b16 %v321
      %v389 = vunpack.c.h.b16 %v321
      %v390 = vunpack.c.l.b16 %v322
      %v391 = vunpack.c.h.b16 %v322
      %v392 = vunpack.c.l.b16 %v323
      %v393 = vunpack.c.h.b16 %v323
      %v394 = vunpack.c.l.b16 %v324
      %v395 = vunpack.c.h.b16 %v324
      %v396 = vunpack.c.l.b16 %v325
      %v397 = vunpack.c.h.b16 %v325
      %v398 = vpack.c.b16 %v366, %v350
      %v399 = vpack.c.b16 %v367, %v351
      %v400 = vpack.c.b16 %v368, %v352
      %v401 = vpack.c.b16 %v369, %v353
      %v402 = vpack.c.b16 %v370, %v354
      %v403 = vpack.c.b16 %v371, %v355
      %v404 = vpack.c.b16 %v372, %v356
      %v405 = vpack.c.b16 %v373, %v357
      %v406 = vpack.c.b16 %v374, %v358
      %v407 = vpack.c.b16 %v375, %v359
      %v408 = vpack.c.b16 %v376, %v360
      %v409 = vpack.c.b16 %v377, %v361
      %v410 = vpack.c.b16 %v378, %v362
      %v411 = vpack.c.b16 %v379, %v363
      %v412 = vpack.c.b16 %v380, %v364
      %v413 = vpack.c.b16 %v381, %v365
      %v414 = vpack.c.b16 %v382, %v382
      %v415 = vpack.c.b16 %v383, %v383
      %v416 = vpack.c.b16 %v384, %v384
      %v417 = vpack.c.b16 %v385, %v385
      %v418 = vpack.c.b16 %v386, %v386
      %v419 = vpack.c.b16 %v387, %v387
      %v420 = vpack.c.b16 %v388, %v388
      %v421 = vpack.c.b16 %v389, %v389
      %v422 = vpack.c.b16 %v390, %v390
      %v423 = vpack.c.b16 %v391, %v391
      %v424 = vpack.c.b16 %v392, %v392
      %v425 = vpack.c.b16 %v393, %v393
      %v426 = vpack.c.b16 %v394, %v394
      %v427 = vpack.c.b16 %v395, %v395
      %v428 = vpack.c.b16 %v396, %v396
      %v429 = vpack.c.b16 %v397, %v397
      %vm446 = vcmask 195584
      %v448 = vsel %vm446, %v301, 0
      %vm450 = vcmask 1043456
      %v452 = vsel %vm450, %v414, 0
      %v455 = vsel %vm450, %v415, 0
      %v458 = vsel %vm450, %v416, 0
      %v461 = vsel %vm450, %v417, 0
      %v464 = vsel %vm450, %v418, 0
      %v467 = vsel %vm450, %v419, 0
      %v470 = vsel %vm450, %v420, 0
      %v473 = vsel %vm450, %v421, 0
      %v476 = vsel %vm450, %v422, 0
      %v479 = vsel %vm450, %v423, 0
      %v482 = vsel %vm450, %v424, 0
      %v485 = vsel %vm450, %v425, 0
      %v488 = vsel %vm450, %v426, 0
      %v491 = vsel %vm450, %v427, 0
      %v494 = vsel %vm450, %v428, 0
      %v497 = vsel %vm450, %v429, 0
      %499 = vmatprep.subr.bf16.mxu0 %v399
      %500 = vmatpush1.bf16.msra.mxu0 %v398
      %501 = vmatprep.subr.bf16.mxu0 %v455
      %502 = vmatpush1.bf16.msra.mxu0 %v452
      %503 = vmatprep.subr.bf16.mxu0 0
      %504 = vmatpush1.bf16.msra.mxu0 0
      %505 = vmatprep.subr.bf16.mxu0 0
      %506 = vmatpush1.bf16.msra.mxu0 0
      %507 = vmatprep.subr.bf16.mxu0 0
      %508 = vmatpush1.bf16.msra.mxu0 0
      %509 = vmatprep.subr.bf16.mxu0 0
      %510 = vmatpush1.bf16.msra.mxu0 0
      %511 = vmatprep.subr.bf16.mxu0 0
      %512 = vmatpush1.bf16.msra.mxu0 0
      %513 = vmatprep.subr.bf16.mxu0 0
      %514 = vmatpush1.bf16.msra.mxu0 0
      %515 = vmatprep.subr.bf16.mxu0 0
      %516 = vmatpush1.bf16.msra.mxu0 0
      %517 = vmatprep.subr.bf16.mxu0 0
      %518 = vmatpush1.bf16.msra.mxu0 0
      %519 = vmatprep.subr.bf16.mxu0 0
      %520 = vmatpush1.bf16.msra.mxu0 0
      %521 = vmatprep.subr.bf16.mxu0 0
      %522 = vmatpush1.bf16.msra.mxu0 0
      %523 = vmatprep.subr.bf16.mxu0 0
      %524 = vmatpush1.bf16.msra.mxu0 0
      %525 = vmatprep.subr.bf16.mxu0 0
      %526 = vmatpush1.bf16.msra.mxu0 0
      %527 = vmatprep.subr.bf16.mxu0 0
      %528 = vmatpush1.bf16.msra.mxu0 0
      %529 = vmatprep.subr.bf16.mxu0 0
      %530 = vmatpush1.bf16.msra.mxu0 0
      %531 = vmatprep.mubr.bf16.mxu0 0
      %532 = vmatmul.mubr.bf16.gmra.mrb[0].mxu0 %v448
      %v533 = vpop.f32.mrb[0].mxu0
      %v534 = vadd.f32 0.0, %v533
      %v535 = vpop.f32.mrb[0].mxu0
      %v536 = vadd.f32 0.0, %v535
      %v537 = vpop.f32.mrb[0].mxu0
      %v538 = vpop.f32.mrb[0].mxu0
      %539 = vdwg.mxu0
      %540 = vmatprep.subr.bf16.mxu0 %v401
      %541 = vmatpush1.bf16.msra.mxu0 %v400
      %542 = vmatprep.subr.bf16.mxu0 %v461
      %543 = vmatpush1.bf16.msra.mxu0 %v458
      %544 = vmatprep.subr.bf16.mxu0 0
      %545 = vmatpush1.bf16.msra.mxu0 0
      %546 = vmatprep.subr.bf16.mxu0 0
      %547 = vmatpush1.bf16.msra.mxu0 0
      %548 = vmatprep.subr.bf16.mxu0 0
      %549 = vmatpush1.bf16.msra.mxu0 0
      %550 = vmatprep.subr.bf16.mxu0 0
      %551 = vmatpush1.bf16.msra.mxu0 0
      %552 = vmatprep.subr.bf16.mxu0 0
      %553 = vmatpush1.bf16.msra.mxu0 0
      %554 = vmatprep.subr.bf16.mxu0 0
      %555 = vmatpush1.bf16.msra.mxu0 0
      %556 = vmatprep.subr.bf16.mxu0 0
      %557 = vmatpush1.bf16.msra.mxu0 0
      %558 = vmatprep.subr.bf16.mxu0 0
      %559 = vmatpush1.bf16.msra.mxu0 0
      %560 = vmatprep.subr.bf16.mxu0 0
      %561 = vmatpush1.bf16.msra.mxu0 0
      %562 = vmatprep.subr.bf16.mxu0 0
      %563 = vmatpush1.bf16.msra.mxu0 0
      %564 = vmatprep.subr.bf16.mxu0 0
      %565 = vmatpush1.bf16.msra.mxu0 0
      %566 = vmatprep.subr.bf16.mxu0 0
      %567 = vmatpush1.bf16.msra.mxu0 0
      %568 = vmatprep.subr.bf16.mxu0 0
      %569 = vmatpush1.bf16.msra.mxu0 0
      %570 = vmatprep.subr.bf16.mxu0 0
      %571 = vmatpush1.bf16.msra.mxu0 0
      %572 = vmatprep.mubr.bf16.mxu0 0
      %573 = vmatmul.mubr.bf16.gmra.mrb[0].mxu0 %v448
      %v574 = vpop.f32.mrb[0].mxu0
      %v575 = vadd.f32 0.0, %v574
      %v576 = vpop.f32.mrb[0].mxu0
      %v577 = vadd.f32 0.0, %v576
      %v578 = vpop.f32.mrb[0].mxu0
      %v579 = vpop.f32.mrb[0].mxu0
      %580 = vdwg.mxu0
      %581 = vmatprep.subr.bf16.mxu0 %v403
      %582 = vmatpush1.bf16.msra.mxu0 %v402
      %583 = vmatprep.subr.bf16.mxu0 %v467
      %584 = vmatpush1.bf16.msra.mxu0 %v464
      %585 = vmatprep.subr.bf16.mxu0 0
      %586 = vmatpush1.bf16.msra.mxu0 0
      %587 = vmatprep.subr.bf16.mxu0 0
      %588 = vmatpush1.bf16.msra.mxu0 0
      %589 = vmatprep.subr.bf16.mxu0 0
      %590 = vmatpush1.bf16.msra.mxu0 0
      %591 = vmatprep.subr.bf16.mxu0 0
      %592 = vmatpush1.bf16.msra.mxu0 0
      %593 = vmatprep.subr.bf16.mxu0 0
      %594 = vmatpush1.bf16.msra.mxu0 0
      %595 = vmatprep.subr.bf16.mxu0 0
      %596 = vmatpush1.bf16.msra.mxu0 0
      %597 = vmatprep.subr.bf16.mxu0 0
      %598 = vmatpush1.bf16.msra.mxu0 0
      %599 = vmatprep.subr.bf16.mxu0 0
      %600 = vmatpush1.bf16.msra.mxu0 0
      %601 = vmatprep.subr.bf16.mxu0 0
      %602 = vmatpush1.bf16.msra.mxu0 0
      %603 = vmatprep.subr.bf16.mxu0 0
      %604 = vmatpush1.bf16.msra.mxu0 0
      %605 = vmatprep.subr.bf16.mxu0 0
      %606 = vmatpush1.bf16.msra.mxu0 0
      %607 = vmatprep.subr.bf16.mxu0 0
      %608 = vmatpush1.bf16.msra.mxu0 0
      %609 = vmatprep.subr.bf16.mxu0 0
      %610 = vmatpush1.bf16.msra.mxu0 0
      %611 = vmatprep.subr.bf16.mxu0 0
      %612 = vmatpush1.bf16.msra.mxu0 0
      %613 = vmatprep.mubr.bf16.mxu0 0
      %614 = vmatmul.mubr.bf16.gmra.mrb[0].mxu0 %v448
      %v615 = vpop.f32.mrb[0].mxu0
      %v616 = vadd.f32 0.0, %v615
      %v617 = vpop.f32.mrb[0].mxu0
      %v618 = vadd.f32 0.0, %v617
      %v619 = vpop.f32.mrb[0].mxu0
      %v620 = vpop.f32.mrb[0].mxu0
      %621 = vdwg.mxu0
      %622 = vmatprep.subr.bf16.mxu0 %v405
      %623 = vmatpush1.bf16.msra.mxu0 %v404
      %624 = vmatprep.subr.bf16.mxu0 %v473
      %625 = vmatpush1.bf16.msra.mxu0 %v470
      %626 = vmatprep.subr.bf16.mxu0 0
      %627 = vmatpush1.bf16.msra.mxu0 0
      %628 = vmatprep.subr.bf16.mxu0 0
      %629 = vmatpush1.bf16.msra.mxu0 0
      %630 = vmatprep.subr.bf16.mxu0 0
      %631 = vmatpush1.bf16.msra.mxu0 0
      %632 = vmatprep.subr.bf16.mxu0 0
      %633 = vmatpush1.bf16.msra.mxu0 0
      %634 = vmatprep.subr.bf16.mxu0 0
      %635 = vmatpush1.bf16.msra.mxu0 0
      %636 = vmatprep.subr.bf16.mxu0 0
      %637 = vmatpush1.bf16.msra.mxu0 0
      %638 = vmatprep.subr.bf16.mxu0 0
      %639 = vmatpush1.bf16.msra.mxu0 0
      %640 = vmatprep.subr.bf16.mxu0 0
      %641 = vmatpush1.bf16.msra.mxu0 0
      %642 = vmatprep.subr.bf16.mxu0 0
      %643 = vmatpush1.bf16.msra.mxu0 0
      %644 = vmatprep.subr.bf16.mxu0 0
      %645 = vmatpush1.bf16.msra.mxu0 0
      %646 = vmatprep.subr.bf16.mxu0 0
      %647 = vmatpush1.bf16.msra.mxu0 0
      %648 = vmatprep.subr.bf16.mxu0 0
      %649 = vmatpush1.bf16.msra.mxu0 0
      %650 = vmatprep.subr.bf16.mxu0 0
      %651 = vmatpush1.bf16.msra.mxu0 0
      %652 = vmatprep.subr.bf16.mxu0 0
      %653 = vmatpush1.bf16.msra.mxu0 0
      %654 = vmatprep.mubr.bf16.mxu0 0
      %655 = vmatmul.mubr.bf16.gmra.mrb[0].mxu0 %v448
      %v656 = vpop.f32.mrb[0].mxu0
      %v657 = vadd.f32 0.0, %v656
      %v658 = vpop.f32.mrb[0].mxu0
      %v659 = vadd.f32 0.0, %v658
      %v660 = vpop.f32.mrb[0].mxu0
      %v661 = vpop.f32.mrb[0].mxu0
      %662 = vdwg.mxu0
      %663 = vmatprep.subr.bf16.mxu0 %v407
      %664 = vmatpush1.bf16.msra.mxu0 %v406
      %665 = vmatprep.subr.bf16.mxu0 %v479
      %666 = vmatpush1.bf16.msra.mxu0 %v476
      %667 = vmatprep.subr.bf16.mxu0 0
      %668 = vmatpush1.bf16.msra.mxu0 0
      %669 = vmatprep.subr.bf16.mxu0 0
      %670 = vmatpush1.bf16.msra.mxu0 0
      %671 = vmatprep.subr.bf16.mxu0 0
      %672 = vmatpush1.bf16.msra.mxu0 0
      %673 = vmatprep.subr.bf16.mxu0 0
      %674 = vmatpush1.bf16.msra.mxu0 0
      %675 = vmatprep.subr.bf16.mxu0 0
      %676 = vmatpush1.bf16.msra.mxu0 0
      %677 = vmatprep.subr.bf16.mxu0 0
      %678 = vmatpush1.bf16.msra.mxu0 0
      %679 = vmatprep.subr.bf16.mxu0 0
      %680 = vmatpush1.bf16.msra.mxu0 0
      %681 = vmatprep.subr.bf16.mxu0 0
      %682 = vmatpush1.bf16.msra.mxu0 0
      %683 = vmatprep.subr.bf16.mxu0 0
      %684 = vmatpush1.bf16.msra.mxu0 0
      %685 = vmatprep.subr.bf16.mxu0 0
      %686 = vmatpush1.bf16.msra.mxu0 0
      %687 = vmatprep.subr.bf16.mxu0 0
      %688 = vmatpush1.bf16.msra.mxu0 0
      %689 = vmatprep.subr.bf16.mxu0 0
      %690 = vmatpush1.bf16.msra.mxu0 0
      %691 = vmatprep.subr.bf16.mxu0 0
      %692 = vmatpush1.bf16.msra.mxu0 0
      %693 = vmatprep.subr.bf16.mxu0 0
      %694 = vmatpush1.bf16.msra.mxu0 0
      %695 = vmatprep.mubr.bf16.mxu0 0
      %696 = vmatmul.mubr.bf16.gmra.mrb[0].mxu0 %v448
      %v697 = vpop.f32.mrb[0].mxu0
      %v698 = vadd.f32 0.0, %v697
      %v699 = vpop.f32.mrb[0].mxu0
      %v700 = vadd.f32 0.0, %v699
      %v701 = vpop.f32.mrb[0].mxu0
      %v702 = vpop.f32.mrb[0].mxu0
      %703 = vdwg.mxu0
      %704 = vmatprep.subr.bf16.mxu0 %v409
      %705 = vmatpush1.bf16.msra.mxu0 %v408
      %706 = vmatprep.subr.bf16.mxu0 %v485
      %707 = vmatpush1.bf16.msra.mxu0 %v482
      %708 = vmatprep.subr.bf16.mxu0 0
      %709 = vmatpush1.bf16.msra.mxu0 0
      %710 = vmatprep.subr.bf16.mxu0 0
      %711 = vmatpush1.bf16.msra.mxu0 0
      %712 = vmatprep.subr.bf16.mxu0 0
      %713 = vmatpush1.bf16.msra.mxu0 0
      %714 = vmatprep.subr.bf16.mxu0 0
      %715 = vmatpush1.bf16.msra.mxu0 0
      %716 = vmatprep.subr.bf16.mxu0 0
      %717 = vmatpush1.bf16.msra.mxu0 0
      %718 = vmatprep.subr.bf16.mxu0 0
      %719 = vmatpush1.bf16.msra.mxu0 0
      %720 = vmatprep.subr.bf16.mxu0 0
      %721 = vmatpush1.bf16.msra.mxu0 0
      %722 = vmatprep.subr.bf16.mxu0 0
      %723 = vmatpush1.bf16.msra.mxu0 0
      %724 = vmatprep.subr.bf16.mxu0 0
      %725 = vmatpush1.bf16.msra.mxu0 0
      %726 = vmatprep.subr.bf16.mxu0 0
      %727 = vmatpush1.bf16.msra.mxu0 0
      %728 = vmatprep.subr.bf16.mxu0 0
      %729 = vmatpush1.bf16.msra.mxu0 0
      %730 = vmatprep.subr.bf16.mxu0 0
      %731 = vmatpush1.bf16.msra.mxu0 0
      %732 = vmatprep.subr.bf16.mxu0 0
      %733 = vmatpush1.bf16.msra.mxu0 0
      %734 = vmatprep.subr.bf16.mxu0 0
      %735 = vmatpush1.bf16.msra.mxu0 0
      %736 = vmatprep.mubr.bf16.mxu0 0
      %737 = vmatmul.mubr.bf16.gmra.mrb[0].mxu0 %v448
      %v738 = vpop.f32.mrb[0].mxu0
      %v739 = vadd.f32 0.0, %v738
      %v740 = vpop.f32.mrb[0].mxu0
      %v741 = vadd.f32 0.0, %v740
      %v742 = vpop.f32.mrb[0].mxu0
      %v743 = vpop.f32.mrb[0].mxu0
      %744 = vdwg.mxu0
      %745 = vmatprep.subr.bf16.mxu0 %v411
      %746 = vmatpush1.bf16.msra.mxu0 %v410
      %747 = vmatprep.subr.bf16.mxu0 %v491
      %748 = vmatpush1.bf16.msra.mxu0 %v488
      %749 = vmatprep.subr.bf16.mxu0 0
      %750 = vmatpush1.bf16.msra.mxu0 0
      %751 = vmatprep.subr.bf16.mxu0 0
      %752 = vmatpush1.bf16.msra.mxu0 0
      %753 = vmatprep.subr.bf16.mxu0 0
      %754 = vmatpush1.bf16.msra.mxu0 0
      %755 = vmatprep.subr.bf16.mxu0 0
      %756 = vmatpush1.bf16.msra.mxu0 0
      %757 = vmatprep.subr.bf16.mxu0 0
      %758 = vmatpush1.bf16.msra.mxu0 0
      %759 = vmatprep.subr.bf16.mxu0 0
      %760 = vmatpush1.bf16.msra.mxu0 0
      %761 = vmatprep.subr.bf16.mxu0 0
      %762 = vmatpush1.bf16.msra.mxu0 0
      %763 = vmatprep.subr.bf16.mxu0 0
      %764 = vmatpush1.bf16.msra.mxu0 0
      %765 = vmatprep.subr.bf16.mxu0 0
      %766 = vmatpush1.bf16.msra.mxu0 0
      %767 = vmatprep.subr.bf16.mxu0 0
      %768 = vmatpush1.bf16.msra.mxu0 0
      %769 = vmatprep.subr.bf16.mxu0 0
      %770 = vmatpush1.bf16.msra.mxu0 0
      %771 = vmatprep.subr.bf16.mxu0 0
      %772 = vmatpush1.bf16.msra.mxu0 0
      %773 = vmatprep.subr.bf16.mxu0 0
      %774 = vmatpush1.bf16.msra.mxu0 0
      %775 = vmatprep.subr.bf16.mxu0 0
      %776 = vmatpush1.bf16.msra.mxu0 0
      %777 = vmatprep.mubr.bf16.mxu0 0
      %778 = vmatmul.mubr.bf16.gmra.mrb[0].mxu0 %v448
      %v779 = vpop.f32.mrb[0].mxu0
      %v780 = vadd.f32 0.0, %v779
      %v781 = vpop.f32.mrb[0].mxu0
      %v782 = vadd.f32 0.0, %v781
      %v783 = vpop.f32.mrb[0].mxu0
      %v784 = vpop.f32.mrb[0].mxu0
      %785 = vdwg.mxu0
      %786 = vmatprep.subr.bf16.mxu0 %v413
      %787 = vmatpush1.bf16.msra.mxu0 %v412
      %788 = vmatprep.subr.bf16.mxu0 %v497
      %789 = vmatpush1.bf16.msra.mxu0 %v494
      %790 = vmatprep.subr.bf16.mxu0 0
      %791 = vmatpush1.bf16.msra.mxu0 0
      %792 = vmatprep.subr.bf16.mxu0 0
      %793 = vmatpush1.bf16.msra.mxu0 0
      %794 = vmatprep.subr.bf16.mxu0 0
      %795 = vmatpush1.bf16.msra.mxu0 0
      %796 = vmatprep.subr.bf16.mxu0 0
      %797 = vmatpush1.bf16.msra.mxu0 0
      %798 = vmatprep.subr.bf16.mxu0 0
      %799 = vmatpush1.bf16.msra.mxu0 0
      %800 = vmatprep.subr.bf16.mxu0 0
      %801 = vmatpush1.bf16.msra.mxu0 0
      %802 = vmatprep.subr.bf16.mxu0 0
      %803 = vmatpush1.bf16.msra.mxu0 0
      %804 = vmatprep.subr.bf16.mxu0 0
      %805 = vmatpush1.bf16.msra.mxu0 0
      %806 = vmatprep.subr.bf16.mxu0 0
      %807 = vmatpush1.bf16.msra.mxu0 0
      %808 = vmatprep.subr.bf16.mxu0 0
      %809 = vmatpush1.bf16.msra.mxu0 0
      %810 = vmatprep.subr.bf16.mxu0 0
      %811 = vmatpush1.bf16.msra.mxu0 0
      %812 = vmatprep.subr.bf16.mxu0 0
      %813 = vmatpush1.bf16.msra.mxu0 0
      %814 = vmatprep.subr.bf16.mxu0 0
      %815 = vmatpush1.bf16.msra.mxu0 0
      %816 = vmatprep.subr.bf16.mxu0 0
      %817 = vmatpush1.bf16.msra.mxu0 0
      %818 = vmatprep.mubr.bf16.mxu0 0
      %819 = vmatmul.mubr.bf16.gmra.mrb[0].mxu0 %v448
      %v820 = vpop.f32.mrb[0].mxu0
      %v821 = vadd.f32 0.0, %v820
      %v822 = vpop.f32.mrb[0].mxu0
      %v823 = vadd.f32 0.0, %v822
      %v824 = vpop.f32.mrb[0].mxu0
      %v825 = vpop.f32.mrb[0].mxu0
      %826 = vdwg.mxu0
      %v827 = vmax.f32 %v534, %v616
      %v828 = vmax.f32 %v536, %v618
      %v829 = vmax.f32 %v575, %v657
      %v830 = vmax.f32 %v577, %v659
      %v831 = vmax.f32 %v698, %v780
      %v832 = vmax.f32 %v700, %v782
      %v833 = vmax.f32 %v739, %v821
      %v834 = vmax.f32 %v741, %v823
      %v835 = vmax.f32 %v827, %v831
      %v836 = vmax.f32 %v828, %v832
      %v837 = vmax.f32 %v829, %v833
      %v838 = vmax.f32 %v830, %v834
      %v839 = vmax.f32 %v835, 0.0
      %v840 = vmax.f32 %v836, 0.0
      %v841 = vmax.f32 %v837, 0.0
      %v842 = vmax.f32 %v838, 0.0
      %v845 = vrot.slane %v841, 7
      %v846 = vrot.slane %v842, 7
      %vm849 = vcmask 1040384
      %v850 = vsel %vm849, %v839, %v845
      %v851 = vsel %vm849, %v840, %v846
      %v852 = vld [vmem:[#allocation2] sm:$0xf]
      %v853 = vpack.c.bf16 %v850, %v850
      %v854 = vpack.c.bf16 %v851, %v851
      %v855 = vld [vmem:[%s292] sm:$0xff]
      %v856 = vld [vmem:[%s292 + $0x8] sm:$0xff]
      %v857 = vld [vmem:[%s292 + $0x10] sm:$0xff]
      %v858 = vld [vmem:[%s292 + $0x18] sm:$0xff]
      %v859 = vld [vmem:[%s292 + $0x20] sm:$0xff]
      %v860 = vld [vmem:[%s292 + $0x28] sm:$0xff]
      %v861 = vld [vmem:[%s292 + $0x30] sm:$0xff]
      %v862 = vld [vmem:[%s292 + $0x38] sm:$0xff]
      %v863 = vld [vmem:[%s292 + $0x40] sm:$0xff]
      %v864 = vld [vmem:[%s292 + $0x48] sm:$0xff]
      %v865 = vld [vmem:[%s292 + $0x50] sm:$0xff]
      %v866 = vld [vmem:[%s292 + $0x58] sm:$0xff]
      %v867 = vld [vmem:[%s292 + $0x60] sm:$0xff]
      %v868 = vld [vmem:[%s292 + $0x68] sm:$0xff]
      %v869 = vld [vmem:[%s292 + $0x70] sm:$0xff]
      %v870 = vld [vmem:[%s292 + $0x78] sm:$0xff]
      %v871 = vld [vmem:[%s292 + $0x80] sm:$0xff]
      %v872 = vld [vmem:[%s292 + $0x88] sm:$0xff]
      %v873 = vld [vmem:[%s292 + $0x90] sm:$0xff]
      %v874 = vld [vmem:[%s292 + $0x98] sm:$0xff]
      %v875 = vld [vmem:[%s292 + $0xa0] sm:$0xff]
      %v876 = vld [vmem:[%s292 + $0xa8] sm:$0xff]
      %v877 = vld [vmem:[%s292 + $0xb0] sm:$0xff]
      %v878 = vld [vmem:[%s292 + $0xb8] sm:$0xff]
      %v879 = vld [vmem:[%s292 + $0xc0] sm:$0xff]
      %v880 = vld [vmem:[%s292 + $0xc8] sm:$0xff]
      %v881 = vld [vmem:[%s292 + $0xd0] sm:$0xff]
      %v882 = vld [vmem:[%s292 + $0xd8] sm:$0xff]
      %v883 = vld [vmem:[%s292 + $0xe0] sm:$0xff]
      %v884 = vld [vmem:[%s292 + $0xe8] sm:$0xff]
      %v885 = vld [vmem:[%s292 + $0xf0] sm:$0xff]
      %v886 = vld [vmem:[%s292 + $0xf8] sm:$0xff]
      %v919 = vunpack.c.l.b16 %v855
      %v920 = vunpack.c.h.b16 %v855
      %v921 = vunpack.c.l.b16 %v856
      %v922 = vunpack.c.h.b16 %v856
      %v923 = vunpack.c.l.b16 %v857
      %v924 = vunpack.c.h.b16 %v857
      %v925 = vunpack.c.l.b16 %v858
      %v926 = vunpack.c.h.b16 %v858
      %v927 = vunpack.c.l.b16 %v859
      %v928 = vunpack.c.h.b16 %v859
      %v929 = vunpack.c.l.b16 %v860
      %v930 = vunpack.c.h.b16 %v860
      %v931 = vunpack.c.l.b16 %v861
      %v932 = vunpack.c.h.b16 %v861
      %v933 = vunpack.c.l.b16 %v862
      %v934 = vunpack.c.h.b16 %v862
      %v935 = vunpack.c.l.b16 %v863
      %v936 = vunpack.c.h.b16 %v863
      %v937 = vunpack.c.l.b16 %v864
      %v938 = vunpack.c.h.b16 %v864
      %v939 = vunpack.c.l.b16 %v865
      %v940 = vunpack.c.h.b16 %v865
      %v941 = vunpack.c.l.b16 %v866
      %v942 = vunpack.c.h.b16 %v866
      %v943 = vunpack.c.l.b16 %v867
      %v944 = vunpack.c.h.b16 %v867
      %v945 = vunpack.c.l.b16 %v868
      %v946 = vunpack.c.h.b16 %v868
      %v947 = vunpack.c.l.b16 %v869
      %v948 = vunpack.c.h.b16 %v869
      %v949 = vunpack.c.l.b16 %v870
      %v950 = vunpack.c.h.b16 %v870
      %v951 = vunpack.c.l.b16 %v871
      %v952 = vunpack.c.h.b16 %v871
      %v953 = vunpack.c.l.b16 %v872
      %v954 = vunpack.c.h.b16 %v872
      %v955 = vunpack.c.l.b16 %v873
      %v956 = vunpack.c.h.b16 %v873
      %v957 = vunpack.c.l.b16 %v874
      %v958 = vunpack.c.h.b16 %v874
      %v959 = vunpack.c.l.b16 %v875
      %v960 = vunpack.c.h.b16 %v875
      %v961 = vunpack.c.l.b16 %v876
      %v962 = vunpack.c.h.b16 %v876
      %v963 = vunpack.c.l.b16 %v877
      %v964 = vunpack.c.h.b16 %v877
      %v965 = vunpack.c.l.b16 %v878
      %v966 = vunpack.c.h.b16 %v878
      %v967 = vunpack.c.l.b16 %v879
      %v968 = vunpack.c.h.b16 %v879
      %v969 = vunpack.c.l.b16 %v880
      %v970 = vunpack.c.h.b16 %v880
      %v971 = vunpack.c.l.b16 %v881
      %v972 = vunpack.c.h.b16 %v881
      %v973 = vunpack.c.l.b16 %v882
      %v974 = vunpack.c.h.b16 %v882
      %v975 = vunpack.c.l.b16 %v883
      %v976 = vunpack.c.h.b16 %v883
      %v977 = vunpack.c.l.b16 %v884
      %v978 = vunpack.c.h.b16 %v884
      %v979 = vunpack.c.l.b16 %v885
      %v980 = vunpack.c.h.b16 %v885
      %v981 = vunpack.c.l.b16 %v886
      %v982 = vunpack.c.h.b16 %v886
      %v983 = vpack.c.b16 %v921, %v919
      %v984 = vpack.c.b16 %v922, %v920
      %v985 = vpack.c.b16 %v925, %v923
      %v986 = vpack.c.b16 %v926, %v924
      %v987 = vpack.c.b16 %v929, %v927
      %v988 = vpack.c.b16 %v930, %v928
      %v989 = vpack.c.b16 %v933, %v931
      %v990 = vpack.c.b16 %v934, %v932
      %v991 = vpack.c.b16 %v937, %v935
      %v992 = vpack.c.b16 %v938, %v936
      %v993 = vpack.c.b16 %v941, %v939
      %v994 = vpack.c.b16 %v942, %v940
      %v995 = vpack.c.b16 %v945, %v943
      %v996 = vpack.c.b16 %v946, %v944
      %v997 = vpack.c.b16 %v949, %v947
      %v998 = vpack.c.b16 %v950, %v948
      %v999 = vpack.c.b16 %v953, %v951
      %v1000 = vpack.c.b16 %v954, %v952
      %v1001 = vpack.c.b16 %v957, %v955
      %v1002 = vpack.c.b16 %v958, %v956
      %v1003 = vpack.c.b16 %v961, %v959
      %v1004 = vpack.c.b16 %v962, %v960
      %v1005 = vpack.c.b16 %v965, %v963
      %v1006 = vpack.c.b16 %v966, %v964
      %v1007 = vpack.c.b16 %v969, %v967
      %v1008 = vpack.c.b16 %v970, %v968
      %v1009 = vpack.c.b16 %v973, %v971
      %v1010 = vpack.c.b16 %v974, %v972
      %v1011 = vpack.c.b16 %v977, %v975
      %v1012 = vpack.c.b16 %v978, %v976
      %v1013 = vpack.c.b16 %v981, %v979
      %v1014 = vpack.c.b16 %v982, %v980
      %1047 = vmatprep.subr.bf16.mxu0 %v984
      %1048 = vmatpush1.bf16.msra.mxu0 %v983
      %1049 = vmatprep.subr.bf16.mxu0 %v986
      %1050 = vmatpush1.bf16.msra.mxu0 %v985
      %1051 = vmatprep.subr.bf16.mxu0 %v988
      %1052 = vmatpush1.bf16.msra.mxu0 %v987
      %1053 = vmatprep.subr.bf16.mxu0 %v990
      %1054 = vmatpush1.bf16.msra.mxu0 %v989
      %1055 = vmatprep.subr.bf16.mxu0 %v992
      %1056 = vmatpush1.bf16.msra.mxu0 %v991
      %1057 = vmatprep.subr.bf16.mxu0 %v994
      %1058 = vmatpush1.bf16.msra.mxu0 %v993
      %1059 = vmatprep.subr.bf16.mxu0 %v996
      %1060 = vmatpush1.bf16.msra.mxu0 %v995
      %1061 = vmatprep.subr.bf16.mxu0 %v998
      %1062 = vmatpush1.bf16.msra.mxu0 %v997
      %1063 = vmatprep.subr.bf16.mxu0 %v1000
      %1064 = vmatpush1.bf16.msra.mxu0 %v999
      %1065 = vmatprep.subr.bf16.mxu0 %v1002
      %1066 = vmatpush1.bf16.msra.mxu0 %v1001
      %1067 = vmatprep.subr.bf16.mxu0 %v1004
      %1068 = vmatpush1.bf16.msra.mxu0 %v1003
      %1069 = vmatprep.subr.bf16.mxu0 %v1006
      %1070 = vmatpush1.bf16.msra.mxu0 %v1005
      %1071 = vmatprep.subr.bf16.mxu0 %v1008
      %1072 = vmatpush1.bf16.msra.mxu0 %v1007
      %1073 = vmatprep.subr.bf16.mxu0 %v1010
      %1074 = vmatpush1.bf16.msra.mxu0 %v1009
      %1075 = vmatprep.subr.bf16.mxu0 %v1012
      %1076 = vmatpush1.bf16.msra.mxu0 %v1011
      %1077 = vmatprep.subr.bf16.mxu0 %v1014
      %1078 = vmatpush1.bf16.msra.mxu0 %v1013
      %1079 = vmatprep.mubr.bf16.mxu0 %v854
      %1080 = vmatmul.mubr.bf16.gmra.mrb[0].mxu0 %v853
      %v1081 = vpop.f32.mrb[0].mxu0
      %v1082 = vadd.f32 0.0, %v1081
      %v1083 = vpop.f32.mrb[0].mxu0
      %v1084 = vadd.f32 0.0, %v1083
      %v1085 = vpop.f32.mrb[0].mxu0
      %v1086 = vpop.f32.mrb[0].mxu0
      %1087 = vdwg.mxu0
      %v1090 = vcombine.low %v1082, %v1084
      %v1092 = vunpack.c.l.s4 1983009808
      %v1093 = vunpack.c.0.s8 %v1092
      %v1094 = vlaneseq
      %v1095 = vshrl.u32 %v1094, 7
      %v1096 = vsub.s32 %v1093, %v1095
      %v1097 = vrot.slane %v1090, %v1096
      %v1099 = vadd.f32 %v852, %v1097
      %1100 = vst [vmem:[#allocation2] sm:$0xf] %v1099
      %p1101 = scmp.eq.s32.totalorder %s21, 3
      // Predicated region
      $region57: #{space_rat_forward.1} parent=51 // pred_check
        %p1102 = pneg %p1101
      $region58: #{space_rat_forward.1} parent=51 // pred_check_branch
        %1104 = sbr.rel (%p1102) target = $region60
      $region59: #{space_rat_forward.1} parent=51 // pred_region
        %v1105 = vld [vmem:[#allocation2] sm:$0xf]
        %v1106 = vld [vmem:[%s3] sm:$0x3]
        %v1108 = vlaneseq
        %v1109 = vshrl.u32 %v1108, 7
        %v1110 = vsub.s32 0, %v1109
        %v1111 = vrot.slane %v1106, %v1110
        %v1112 = vlaneseq
        %v1113 = vshrl.u32 %v1112, 7
        %v1114 = vsub.s32 1, %v1113
        %v1115 = vrot.slane %v1106, %v1114
        %v1116 = vcombine.low %v1111, %v1115
        %v1118 = vunpack.c.l.s4 1983009808
        %v1119 = vunpack.c.0.s8 %v1118
        %v1120 = vlaneseq
        %v1121 = vshrl.u32 %v1120, 7
        %v1122 = vsub.s32 %v1119, %v1121
        %v1123 = vrot.slane %v1116, %v1122
        %v1125 = vadd.f32 %v1105, %v1123
        %v1126 = vmax.f32 %v1125, 0.0
        %v1129 = vunpack.c.l.s4 1983009808
        %v1130 = vunpack.c.0.s8 %v1129
        %v1131 = vlaneseq
        %v1132 = vshrl.u32 %v1131, 7
        %v1133 = vsub.s32 %v1130, %v1132
        %v1134 = vrot.slane %v1126, %v1133
        %v1135 = vcombine.high %v1134, %v1134
        %v1138 = vpack.c.bf16 %v1134, %v1134
        %v1139 = vpack.c.bf16 %v1135, %v1135
        %v1140 = vld [vmem:[%s4] sm:$0xf]
        %v1141 = vld [vmem:[%s4 + $0x4] sm:$0xf]
        %v1142 = vld [vmem:[%s4 + $0x8] sm:$0xf]
        %v1143 = vld [vmem:[%s4 + $0xc] sm:$0xf]
        %v1144 = vld [vmem:[%s4 + $0x10] sm:$0xf]
        %v1145 = vld [vmem:[%s4 + $0x14] sm:$0xf]
        %v1146 = vld [vmem:[%s4 + $0x18] sm:$0xf]
        %v1147 = vld [vmem:[%s4 + $0x1c] sm:$0xf]
        %v1148 = vld [vmem:[%s4 + $0x20] sm:$0xf]
        %v1149 = vld [vmem:[%s4 + $0x24] sm:$0xf]
        %v1150 = vld [vmem:[%s4 + $0x28] sm:$0xf]
        %v1151 = vld [vmem:[%s4 + $0x2c] sm:$0xf]
        %v1152 = vld [vmem:[%s4 + $0x30] sm:$0xf]
        %v1153 = vld [vmem:[%s4 + $0x34] sm:$0xf]
        %v1154 = vld [vmem:[%s4 + $0x38] sm:$0xf]
        %v1155 = vld [vmem:[%s4 + $0x3c] sm:$0xf]
        %v1156 = vld [vmem:[%s4 + $0x40] sm:$0xf]
        %v1157 = vld [vmem:[%s4 + $0x44] sm:$0xf]
        %v1158 = vld [vmem:[%s4 + $0x48] sm:$0xf]
        %v1159 = vld [vmem:[%s4 + $0x4c] sm:$0xf]
        %v1160 = vld [vmem:[%s4 + $0x50] sm:$0xf]
        %v1161 = vld [vmem:[%s4 + $0x54] sm:$0xf]
        %v1162 = vld [vmem:[%s4 + $0x58] sm:$0xf]
        %v1163 = vld [vmem:[%s4 + $0x5c] sm:$0xf]
        %v1164 = vld [vmem:[%s4 + $0x60] sm:$0xf]
        %v1165 = vld [vmem:[%s4 + $0x64] sm:$0xf]
        %v1166 = vld [vmem:[%s4 + $0x68] sm:$0xf]
        %v1167 = vld [vmem:[%s4 + $0x6c] sm:$0xf]
        %v1168 = vld [vmem:[%s4 + $0x70] sm:$0xf]
        %v1169 = vld [vmem:[%s4 + $0x74] sm:$0xf]
        %v1170 = vld [vmem:[%s4 + $0x78] sm:$0xf]
        %v1171 = vld [vmem:[%s4 + $0x7c] sm:$0xf]
        %v1172 = vld [vmem:[%s5] sm:$0x1]
        %v1174 = vlaneseq
        %v1175 = vshrl.u32 %v1174, 7
        %v1176 = vsub.s32 0, %v1175
        %v1177 = vrot.slane %v1172, %v1176
        %v1211 = vunpack.c.l.b16 %v1140
        %v1212 = vunpack.c.l.b16 %v1141
        %v1213 = vunpack.c.l.b16 %v1142
        %v1214 = vunpack.c.l.b16 %v1143
        %v1215 = vunpack.c.l.b16 %v1144
        %v1216 = vunpack.c.l.b16 %v1145
        %v1217 = vunpack.c.l.b16 %v1146
        %v1218 = vunpack.c.l.b16 %v1147
        %v1219 = vunpack.c.l.b16 %v1148
        %v1220 = vunpack.c.l.b16 %v1149
        %v1221 = vunpack.c.l.b16 %v1150
        %v1222 = vunpack.c.l.b16 %v1151
        %v1223 = vunpack.c.l.b16 %v1152
        %v1224 = vunpack.c.l.b16 %v1153
        %v1225 = vunpack.c.l.b16 %v1154
        %v1226 = vunpack.c.l.b16 %v1155
        %v1227 = vunpack.c.l.b16 %v1156
        %v1228 = vunpack.c.l.b16 %v1157
        %v1229 = vunpack.c.l.b16 %v1158
        %v1230 = vunpack.c.l.b16 %v1159
        %v1231 = vunpack.c.l.b16 %v1160
        %v1232 = vunpack.c.l.b16 %v1161
        %v1233 = vunpack.c.l.b16 %v1162
        %v1234 = vunpack.c.l.b16 %v1163
        %v1235 = vunpack.c.l.b16 %v1164
        %v1236 = vunpack.c.l.b16 %v1165
        %v1237 = vunpack.c.l.b16 %v1166
        %v1238 = vunpack.c.l.b16 %v1167
        %v1239 = vunpack.c.l.b16 %v1168
        %v1240 = vunpack.c.l.b16 %v1169
        %v1241 = vunpack.c.l.b16 %v1170
        %v1242 = vunpack.c.l.b16 %v1171
        %v1243 = vpack.c.b16 %v1212, %v1211
        %v1244 = vpack.c.b16 %v1214, %v1213
        %v1245 = vpack.c.b16 %v1216, %v1215
        %v1246 = vpack.c.b16 %v1218, %v1217
        %v1247 = vpack.c.b16 %v1220, %v1219
        %v1248 = vpack.c.b16 %v1222, %v1221
        %v1249 = vpack.c.b16 %v1224, %v1223
        %v1250 = vpack.c.b16 %v1226, %v1225
        %v1251 = vpack.c.b16 %v1228, %v1227
        %v1252 = vpack.c.b16 %v1230, %v1229
        %v1253 = vpack.c.b16 %v1232, %v1231
        %v1254 = vpack.c.b16 %v1234, %v1233
        %v1255 = vpack.c.b16 %v1236, %v1235
        %v1256 = vpack.c.b16 %v1238, %v1237
        %v1257 = vpack.c.b16 %v1240, %v1239
        %v1258 = vpack.c.b16 %v1242, %v1241
        %1275 = vmatprep.subr.bf16.mxu0 0
        %1276 = vmatpush1.bf16.msra.mxu0 %v1243
        %1277 = vmatprep.subr.bf16.mxu0 0
        %1278 = vmatpush1.bf16.msra.mxu0 %v1244
        %1279 = vmatprep.subr.bf16.mxu0 0
        %1280 = vmatpush1.bf16.msra.mxu0 %v1245
        %1281 = vmatprep.subr.bf16.mxu0 0
        %1282 = vmatpush1.bf16.msra.mxu0 %v1246
        %1283 = vmatprep.subr.bf16.mxu0 0
        %1284 = vmatpush1.bf16.msra.mxu0 %v1247
        %1285 = vmatprep.subr.bf16.mxu0 0
        %1286 = vmatpush1.bf16.msra.mxu0 %v1248
        %1287 = vmatprep.subr.bf16.mxu0 0
        %1288 = vmatpush1.bf16.msra.mxu0 %v1249
        %1289 = vmatprep.subr.bf16.mxu0 0
        %1290 = vmatpush1.bf16.msra.mxu0 %v1250
        %1291 = vmatprep.subr.bf16.mxu0 0
        %1292 = vmatpush1.bf16.msra.mxu0 %v1251
        %1293 = vmatprep.subr.bf16.mxu0 0
        %1294 = vmatpush1.bf16.msra.mxu0 %v1252
        %1295 = vmatprep.subr.bf16.mxu0 0
        %1296 = vmatpush1.bf16.msra.mxu0 %v1253
        %1297 = vmatprep.subr.bf16.mxu0 0
        %1298 = vmatpush1.bf16.msra.mxu0 %v1254
        %1299 = vmatprep.subr.bf16.mxu0 0
        %1300 = vmatpush1.bf16.msra.mxu0 %v1255
        %1301 = vmatprep.subr.bf16.mxu0 0
        %1302 = vmatpush1.bf16.msra.mxu0 %v1256
        %1303 = vmatprep.subr.bf16.mxu0 0
        %1304 = vmatpush1.bf16.msra.mxu0 %v1257
        %1305 = vmatprep.subr.bf16.mxu0 0
        %1306 = vmatpush1.bf16.msra.mxu0 %v1258
        %1307 = vmatprep.mubr.bf16.mxu0 %v1139
        %1308 = vmatmul.mubr.bf16.gmra.mrb[0].mxu0 %v1138
        %v1309 = vpop.f32.mrb[0].mxu0
        %v1310 = vadd.f32 %v1177, %v1309
        %v1311 = vpop.f32.mrb[0].mxu0
        %v1312 = vpop.f32.mrb[0].mxu0
        %v1313 = vpop.f32.mrb[0].mxu0
        %1314 = vdwg.mxu0
        %v1315 = vmax.f32 %v1310, 0.0
        %v1316 = vpack.c.bf16 %v1315, %v1315
        %v1317 = vld [vmem:[%s6] sm:$0xf]
        %v1318 = vld [vmem:[%s6 + $0x4] sm:$0xf]
        %v1319 = vld [vmem:[%s6 + $0x8] sm:$0xf]
        %v1320 = vld [vmem:[%s6 + $0xc] sm:$0xf]
        %v1321 = vld [vmem:[%s6 + $0x10] sm:$0xf]
        %v1322 = vld [vmem:[%s6 + $0x14] sm:$0xf]
        %v1323 = vld [vmem:[%s6 + $0x18] sm:$0xf]
        %v1324 = vld [vmem:[%s6 + $0x1c] sm:$0xf]
        %v1325 = vld [vmem:[%s6 + $0x20] sm:$0xf]
        %v1326 = vld [vmem:[%s6 + $0x24] sm:$0xf]
        %v1327 = vld [vmem:[%s6 + $0x28] sm:$0xf]
        %v1328 = vld [vmem:[%s6 + $0x2c] sm:$0xf]
        %v1329 = vld [vmem:[%s6 + $0x30] sm:$0xf]
        %v1330 = vld [vmem:[%s6 + $0x34] sm:$0xf]
        %v1331 = vld [vmem:[%s6 + $0x38] sm:$0xf]
        %v1332 = vld [vmem:[%s6 + $0x3c] sm:$0xf]
        %v1333 = vld [vmem:[#allocation3] sm:$0x1]
        %v1335 = vlaneseq
        %v1336 = vshrl.u32 %v1335, 7
        %v1337 = vsub.s32 0, %v1336
        %v1338 = vrot.slane %v1333, %v1337
        %v1356 = vunpack.c.l.b16 %v1317
        %v1357 = vunpack.c.l.b16 %v1318
        %v1358 = vunpack.c.l.b16 %v1319
        %v1359 = vunpack.c.l.b16 %v1320
        %v1360 = vunpack.c.l.b16 %v1321
        %v1361 = vunpack.c.l.b16 %v1322
        %v1362 = vunpack.c.l.b16 %v1323
        %v1363 = vunpack.c.l.b16 %v1324
        %v1364 = vunpack.c.l.b16 %v1325
        %v1365 = vunpack.c.l.b16 %v1326
        %v1366 = vunpack.c.l.b16 %v1327
        %v1367 = vunpack.c.l.b16 %v1328
        %v1368 = vunpack.c.l.b16 %v1329
        %v1369 = vunpack.c.l.b16 %v1330
        %v1370 = vunpack.c.l.b16 %v1331
        %v1371 = vunpack.c.l.b16 %v1332
        %v1372 = vpack.c.b16 %v1357, %v1356
        %v1373 = vpack.c.b16 %v1359, %v1358
        %v1374 = vpack.c.b16 %v1361, %v1360
        %v1375 = vpack.c.b16 %v1363, %v1362
        %v1376 = vpack.c.b16 %v1365, %v1364
        %v1377 = vpack.c.b16 %v1367, %v1366
        %v1378 = vpack.c.b16 %v1369, %v1368
        %v1379 = vpack.c.b16 %v1371, %v1370
        %1388 = vmatprep.subr.bf16.mxu0 0
        %1389 = vmatpush1.bf16.msra.mxu0 %v1372
        %1390 = vmatprep.subr.bf16.mxu0 0
        %1391 = vmatpush1.bf16.msra.mxu0 %v1373
        %1392 = vmatprep.subr.bf16.mxu0 0
        %1393 = vmatpush1.bf16.msra.mxu0 %v1374
        %1394 = vmatprep.subr.bf16.mxu0 0
        %1395 = vmatpush1.bf16.msra.mxu0 %v1375
        %1396 = vmatprep.subr.bf16.mxu0 0
        %1397 = vmatpush1.bf16.msra.mxu0 %v1376
        %1398 = vmatprep.subr.bf16.mxu0 0
        %1399 = vmatpush1.bf16.msra.mxu0 %v1377
        %1400 = vmatprep.subr.bf16.mxu0 0
        %1401 = vmatpush1.bf16.msra.mxu0 %v1378
        %1402 = vmatprep.subr.bf16.mxu0 0
        %1403 = vmatpush1.bf16.msra.mxu0 %v1379
        %1404 = vmatprep.subr.bf16.mxu0 0
        %1405 = vmatpush1.bf16.msra.mxu0 0
        %1406 = vmatprep.subr.bf16.mxu0 0
        %1407 = vmatpush1.bf16.msra.mxu0 0
        %1408 = vmatprep.subr.bf16.mxu0 0
        %1409 = vmatpush1.bf16.msra.mxu0 0
        %1410 = vmatprep.subr.bf16.mxu0 0
        %1411 = vmatpush1.bf16.msra.mxu0 0
        %1412 = vmatprep.subr.bf16.mxu0 0
        %1413 = vmatpush1.bf16.msra.mxu0 0
        %1414 = vmatprep.subr.bf16.mxu0 0
        %1415 = vmatpush1.bf16.msra.mxu0 0
        %1416 = vmatprep.subr.bf16.mxu0 0
        %1417 = vmatpush1.bf16.msra.mxu0 0
        %1418 = vmatprep.subr.bf16.mxu0 0
        %1419 = vmatpush1.bf16.msra.mxu0 0
        %1420 = vmatprep.mubr.bf16.mxu0 0
        %1421 = vmatmul.mubr.bf16.gmra.mrb[0].mxu0 %v1316
        %v1422 = vpop.f32.mrb[0].mxu0
        %v1423 = vadd.f32 %v1338, %v1422
        %v1424 = vpop.f32.mrb[0].mxu0
        %v1425 = vpop.f32.mrb[0].mxu0
        %v1426 = vpop.f32.mrb[0].mxu0
        %1427 = vdwg.mxu0
        %vm1428 = vcmask 1024
        %1429 = vst.msk [vmem:[%s8] sm:$0x3] %vm1428, %v1423
      $region60: #{space_rat_forward.1} parent=51 // pred_fallthru
        _
      // Predicated region
      $region61: #{space_rat_forward.1} parent=51 // pred_check
        %p1430 = pneg %p207
      $region62: #{space_rat_forward.1} parent=51 // pred_check_branch
        %1432 = sbr.rel (%p1430) target = $region64
      $region63: #{space_rat_forward.1} parent=51 // pred_region
        _
      $region64: #{space_rat_forward.1} parent=51 // pred_fallthru
        _
      // Predicated region
      $region65: #{space_rat_forward.1} parent=51 // pred_check
        %p1433 = pneg %p207
      $region66: #{space_rat_forward.1} parent=51 // pred_check_branch
        %1435 = sbr.rel (%p1433) target = $region68
      $region67: #{space_rat_forward.1} parent=51 // pred_region
        _
      $region68: #{space_rat_forward.1} parent=51 // pred_fallthru
        _
    $region52: #{space_rat_forward.1} parent=5 // pred_fallthru
      _
    %p1436 = scmp.le.s32.totalorder 2, %s16
    // Predicated region
    $region69: #{space_rat_forward.1} parent=5 // pred_check
      %p1437 = pneg %p1436
    $region70: #{space_rat_forward.1} parent=5 // pred_check_branch
      %1439 = sbr.rel (%p1437) target = $region72
    $region71: #{space_rat_forward.1} parent=5 // pred_region
      %s1440 = ssub.s32 %s16, 2
    $region72: #{space_rat_forward.1} parent=5 // pred_fallthru
      _
  $region6: #{space_rat_forward.1} parent=0 // loop_footer
    %s20 = sadd.s32 1, %s16
  $region7: #{space_rat_forward.1} parent=0 // loop_footer_branch
    %15 = sbr.rel target = $region3
  $region8: #{space_rat_forward.1} parent=0 // loop_exit
    _

</llo_original>
